<compile_context>
chip_gen: v5e
topology: v5e:2x2
jax: 0.10.0
libtpu: 0.0.40
codegen_flags: <defaults>
</compile_context>

<pallas_src>
import functools
import math

import jax
import jax.numpy as jnp
from jax.experimental import pallas as pl
from jax.experimental.pallas import tpu as pltpu

LANE = 128
_LN_EPS = 1e-5
_VMEM_LIMIT_BYTES = 40 * 1024 * 1024          # explicit scoped-VMEM budget (all gens)
_RESIDENT_H_BYTES = 8 * 1024 * 1024           # <=16 MiB with double buffering


# ----------------------------------------------------------------------------
# helpers
# ----------------------------------------------------------------------------
def _round_up(n, m):
    return ((n + m - 1) // m) * m


def _pad2d(a, rows, cols, dtype=None):
    """Zero-pad a 2D array to (rows, cols), optionally casting dtype."""
    out_dtype = a.dtype if dtype is None else dtype
    out = jnp.zeros((rows, cols), out_dtype)
    return out.at[: a.shape[0], : a.shape[1]].set(a.astype(out_dtype))


def _layernorm(h, gamma, beta, true_dim):
    """LayerNorm over the last axis; masks padded lanes when padded width > true_dim."""
    d_pad = h.shape[-1]
    if d_pad == true_dim:
        mean = jnp.mean(h, axis=-1, keepdims=True)
        diff = h - mean
        var = jnp.mean(diff * diff, axis=-1, keepdims=True)
    else:
        lane = jax.lax.broadcasted_iota(jnp.int32, h.shape, h.ndim - 1)
        mask = (lane < true_dim).astype(h.dtype)
        hm = h * mask
        mean = jnp.sum(hm, axis=-1, keepdims=True) / true_dim
        diff = (h - mean) * mask
        var = jnp.sum(diff * diff, axis=-1, keepdims=True) / true_dim
    inv = jax.lax.rsqrt(var + _LN_EPS)
    return diff * inv * gamma + beta


# ----------------------------------------------------------------------------
# Pallas kernels
# ----------------------------------------------------------------------------
def _mlp_in_kernel(x_ref, w1_ref, b1_ref, g1_ref, be1_ref, h_ref, *, hid_dim):
    """h = LayerNorm1(gelu(x @ W1 + b1)) for one row tile (bf16 in / bf16 out)."""
    h = jnp.dot(x_ref[...], w1_ref[...], preferred_element_type=jnp.float32)
    h = h + b1_ref[...]
    h = jax.nn.gelu(h, approximate=True)
    h = _layernorm(h, g1_ref[...], be1_ref[...], hid_dim)
    h_ref[...] = h.astype(h_ref.dtype)


def _propagate_body(a_ref, h_ref, acc_ref, *, block_k):
    """acc += A_tile @ H_tile (bf16 MXU operands, f32 accumulator)."""
    k = pl.program_id(1)

    @pl.when(k == 0)
    def _():
        acc_ref[...] = jnp.zeros_like(acc_ref)

    if block_k is None:
        # Streaming H: the BlockSpec already delivered the (TK, hid) tile.
        h_tile = h_ref[...]
    else:
        # Resident H: whole matrix lives in VMEM; slice the contraction window.
        start = pl.multiple_of(k * block_k, 128)
        h_tile = h_ref[pl.ds(start, block_k), :]

    acc_ref[...] += jnp.dot(a_ref[...], h_tile, preferred_element_type=jnp.float32)


def _spmm_kernel(a_ref, h_ref, o_ref, acc_ref, *, block_k):
    """o = A @ H (one SGConv hop, no epilogue)."""
    _propagate_body(a_ref, h_ref, acc_ref, block_k=block_k)

    @pl.when(pl.program_id(1) == pl.num_programs(1) - 1)
    def _():
        o_ref[...] = acc_ref[...].astype(o_ref.dtype)


def _spmm_epilogue_kernel(a_ref, h_ref, wc_ref, bc_ref, g2_ref, be2_ref,
                          w2_ref, b2_ref, o_ref, acc_ref, *, block_k, hid_dim):
    """o = LN2(gelu((A @ H) @ Wc + bc)) @ W2 + b2 for one row tile."""
    _propagate_body(a_ref, h_ref, acc_ref, block_k=block_k)

    @pl.when(pl.program_id(1) == pl.num_programs(1) - 1)
    def _():
        z = jnp.dot(acc_ref[...].astype(jnp.bfloat16), wc_ref[...],
                    preferred_element_type=jnp.float32) + bc_ref[...]
        z = jax.nn.gelu(z, approximate=True)
        z = _layernorm(z, g2_ref[...], be2_ref[...], hid_dim)
        out = jnp.dot(z.astype(jnp.bfloat16), w2_ref[...],
                      preferred_element_type=jnp.float32) + b2_ref[...]
        o_ref[...] = out.astype(o_ref.dtype)


# ----------------------------------------------------------------------------
# JAX glue: gcn_norm (add self loops + symmetric normalization) -> dense A_norm
# ----------------------------------------------------------------------------
def gcn_norm_dense(edge_index, edge_weight, num_nodes):
    row, col = edge_index[0], edge_index[1]
    if edge_weight is None:
        edge_weight = jnp.ones((edge_index.shape[1],), dtype=jnp.float32)

    loop_idx = jnp.arange(num_nodes, dtype=edge_index.dtype)
    row = jnp.concatenate([row, loop_idx])
    col = jnp.concatenate([col, loop_idx])
    w = jnp.concatenate([edge_weight.astype(jnp.float32),
                         jnp.ones((num_nodes,), jnp.float32)])

    deg = jnp.zeros((num_nodes,), jnp.float32).at[col].add(w)
    deg_inv_sqrt = jnp.where(deg > 0, jax.lax.rsqrt(deg), 0.0)
    norm = deg_inv_sqrt[row] * w * deg_inv_sqrt[col]

    # A_norm[dst, src] so that (A_norm @ X)[i] = sum_j norm(j->i) X[j].
    return jnp.zeros((num_nodes, num_nodes), jnp.float32).at[col, row].add(norm)


# ----------------------------------------------------------------------------
# Forward wrapper
# ----------------------------------------------------------------------------
def sgc_lr_forward_pallas(x, edge_index, edge_weight, params, *, K, num_hid,
                          tile_m=256, tile_k=512,
                          resident_h_bytes=_RESIDENT_H_BYTES):
    assert K >= 1
    n, f_in = x.shape
    f_out = params["w2"].shape[1]
    bf16 = jnp.bfloat16

    # Cheap XLA glue: symmetric-normalized adjacency (single O(N^2) materialization,
    # no O(N^3) power -- the kernel applies it K times instead).
    a_norm = gcn_norm_dense(edge_index, edge_weight, n)

    # Lane-dense / tile-aligned padding.
    n128 = _round_up(n, LANE)
    tm = min(tile_m, n128)                     # row tile
    tk = min(tile_k, n128)                     # contraction tile
    n_pad = _round_up(n, math.lcm(tm, tk))
    fin_pad = _round_up(f_in, LANE)
    hid_pad = _round_up(num_hid, LANE)
    fout_pad = _round_up(f_out, LANE)

    x_p = _pad2d(x, n_pad, fin_pad, bf16)
    a_p = _pad2d(a_norm, n_pad, n_pad, bf16)
    w1_p = _pad2d(params["w1"], fin_pad, hid_pad, bf16)
    wc_p = _pad2d(params["wc"], hid_pad, hid_pad, bf16)
    w2_p = _pad2d(params["w2"], hid_pad, fout_pad, bf16)
    b1_p = _pad2d(params["b1"].reshape(1, -1), 1, hid_pad)
    bc_p = _pad2d(params["bc"].reshape(1, -1), 1, hid_pad)
    b2_p = _pad2d(params["b2"].reshape(1, -1), 1, fout_pad)
    g1_p = _pad2d(params["g1"].reshape(1, -1), 1, hid_pad)
    be1_p = _pad2d(params["be1"].reshape(1, -1), 1, hid_pad)
    g2_p = _pad2d(params["g2"].reshape(1, -1), 1, hid_pad)
    be2_p = _pad2d(params["be2"].reshape(1, -1), 1, hid_pad)

    n_row_tiles = n_pad // tm
    n_k_tiles = n_pad // tk

    # ---- Stage 1: h = LN1(gelu(x @ W1 + b1)), row-tiled -----------------------
    mlp_kernel = functools.partial(_mlp_in_kernel, hid_dim=num_hid)
    h = pl.pallas_call(
        mlp_kernel,
        out_shape=jax.ShapeDtypeStruct((n_pad, hid_pad), bf16),
        grid=(n_row_tiles,),
        in_specs=[
            pl.BlockSpec((tm, fin_pad), lambda i: (i, 0)),
            pl.BlockSpec((fin_pad, hid_pad), lambda i: (0, 0)),
            pl.BlockSpec((1, hid_pad), lambda i: (0, 0)),
            pl.BlockSpec((1, hid_pad), lambda i: (0, 0)),
            pl.BlockSpec((1, hid_pad), lambda i: (0, 0)),
        ],
        out_specs=pl.BlockSpec((tm, hid_pad), lambda i: (i, 0)),
        compiler_params=pltpu.CompilerParams(
            dimension_semantics=("parallel",),
            vmem_limit_bytes=_VMEM_LIMIT_BYTES),
    )(x_p, w1_p, b1_p, g1_p, be1_p)

    # ---- Stage 2: K propagation hops; epilogue fused into the last hop --------
    h_bytes = n_pad * hid_pad * 2
    use_resident_h = h_bytes <= resident_h_bytes
    if use_resident_h:
        # Whole H DMA'd once (constant index_map -> stays resident in VMEM).
        h_spec = pl.BlockSpec((n_pad, hid_pad), lambda i, k: (0, 0))
        block_k = tk
        h_read_bytes = h_bytes
    else:
        # Stream H in (TK, hid) tiles; re-read once per row tile.
        h_spec = pl.BlockSpec((tk, hid_pad), lambda i, k: (k, 0))
        block_k = None
        h_read_bytes = h_bytes * n_row_tiles

    a_spec = pl.BlockSpec((tm, tk), lambda i, k: (i, k))
    acc_scratch = pltpu.VMEM((tm, hid_pad), jnp.float32)
    grid = (n_row_tiles, n_k_tiles)
    prop_params = pltpu.CompilerParams(
        dimension_semantics=("parallel", "arbitrary"),
        vmem_limit_bytes=_VMEM_LIMIT_BYTES)

    a_bytes = n_pad * n_pad * 2
    spmm_cost = pl.CostEstimate(
        flops=int(2 * n_pad * n_pad * hid_pad),
        transcendentals=0,
        bytes_accessed=int(a_bytes + h_read_bytes + h_bytes))

    spmm = pl.pallas_call(
        functools.partial(_spmm_kernel, block_k=block_k),
        out_shape=jax.ShapeDtypeStruct((n_pad, hid_pad), bf16),
        grid=grid,
        in_specs=[a_spec, h_spec],
        out_specs=pl.BlockSpec((tm, hid_pad), lambda i, k: (i, 0)),
        scratch_shapes=[acc_scratch],
        compiler_params=prop_params,
        cost_estimate=spmm_cost,
    )

    for _ in range(K - 1):          # plain hops (no epilogue)
        h = spmm(a_p, h)

    final_cost = pl.CostEstimate(
        flops=int(2 * n_pad * n_pad * hid_pad
                  + 2 * n_pad * hid_pad * hid_pad
                  + 2 * n_pad * hid_pad * fout_pad),
        transcendentals=int(2 * n_pad * hid_pad),
        bytes_accessed=int(a_bytes + h_read_bytes
                           + wc_p.size * 2 + w2_p.size * 2
                           + n_pad * fout_pad * 2))

    out = pl.pallas_call(
        functools.partial(_spmm_epilogue_kernel, block_k=block_k, hid_dim=num_hid),
        out_shape=jax.ShapeDtypeStruct((n_pad, fout_pad), bf16),
        grid=grid,
        in_specs=[
            a_spec,                                                 # A tile
            h_spec,                                                 # H (resident/stream)
            pl.BlockSpec((hid_pad, hid_pad), lambda i, k: (0, 0)),  # Wc
            pl.BlockSpec((1, hid_pad), lambda i, k: (0, 0)),        # bc
            pl.BlockSpec((1, hid_pad), lambda i, k: (0, 0)),        # gamma2
            pl.BlockSpec((1, hid_pad), lambda i, k: (0, 0)),        # beta2
            pl.BlockSpec((hid_pad, fout_pad), lambda i, k: (0, 0)), # W2
            pl.BlockSpec((1, fout_pad), lambda i, k: (0, 0)),       # b2
        ],
        out_specs=pl.BlockSpec((tm, fout_pad), lambda i, k: (i, 0)),
        scratch_shapes=[acc_scratch],
        compiler_params=prop_params,
        cost_estimate=final_cost,
    )(a_p, h, wc_p, bc_p, g2_p, be2_p, w2_p, b2_p)

    return out[:n, :f_out].astype(jnp.float32)


# ----------------------------------------------------------------------------
# Reference with matched numerics (bf16 MXU operands, f32 accumulation,
# bf16 re-cast between propagation hops -- same as the kernel path)
# ----------------------------------------------------------------------------
def sgc_lr_reference(x, edge_index, edge_weight, params, *, K, num_hid):
    bf16, f32 = jnp.bfloat16, jnp.float32

    def ln(h, g, b):
        mean = jnp.mean(h, axis=-1, keepdims=True)
        var = jnp.mean((h - mean) ** 2, axis=-1, keepdims=True)
        return (h - mean) * jax.lax.rsqrt(var + _LN_EPS) * g + b

    a = gcn_norm_dense(edge_index, edge_weight, x.shape[0]).astype(bf16)

    h = jnp.dot(x.astype(bf16), params["w1"].astype(bf16),
                preferred_element_type=f32) + params["b1"]
    h = jax.nn.gelu(h, approximate=True)
    h = ln(h, params["g1"], params["be1"]).astype(bf16)

    for _ in range(K):
        h = jnp.dot(a, h, preferred_element_type=f32).astype(bf16)

    z = jnp.dot(h, params["wc"].astype(bf16),
                preferred_element_type=f32) + params["bc"]
    z = jax.nn.gelu(z, approximate=True)
    z = ln(z, params["g2"], params["be2"])
    return jnp.dot(z.astype(bf16), params["w2"].astype(bf16),
                   preferred_element_type=f32) + params["b2"]


# ----------------------------------------------------------------------------
# Test harness
# ----------------------------------------------------------------------------
def _make_ring_graph(num_nodes):
    src = jnp.arange(num_nodes, dtype=jnp.int32)
    dst = (src + 1) % num_nodes
    return jnp.stack([jnp.concatenate([src, dst]),
                      jnp.concatenate([dst, src])], axis=0)


def _make_params(key, f_in, num_hid, f_out):
    keys = jax.random.split(key, 10)

    def glorot(k, shape):
        lim = (6.0 / (shape[0] + shape[1])) ** 0.5
        return jax.random.uniform(k, shape, jnp.float32, minval=-lim, maxval=lim)

    return dict(
        w1=glorot(keys[0], (f_in, num_hid)),
        b1=0.1 * jax.random.normal(keys[1], (num_hid,), jnp.float32),
        wc=glorot(keys[2], (num_hid, num_hid)),
        bc=0.1 * jax.random.normal(keys[3], (num_hid,), jnp.float32),
        w2=glorot(keys[4], (num_hid, f_out)),
        b2=0.1 * jax.random.normal(keys[5], (f_out,), jnp.float32),
        g1=1.0 + 0.1 * jax.random.normal(keys[6], (num_hid,), jnp.float32),
        be1=0.1 * jax.random.normal(keys[7], (num_hid,), jnp.float32),
        g2=jnp.ones((num_hid,), jnp.float32),
        be2=jnp.zeros((num_hid,), jnp.float32),
    )


def _run_case(key, *, n, f_in, num_hid, f_out, K, weighted, **fwd_kwargs):
    kx, kw, kp = jax.random.split(key, 3)
    x = jax.random.normal(kx, (n, f_in), jnp.float32)
    edge_index = _make_ring_graph(n)
    edge_weight = None
    if weighted:
        edge_weight = jax.random.uniform(kw, (edge_index.shape[1],), jnp.float32,
                                         minval=0.5, maxval=1.5)
    params = _make_params(kp, f_in, num_hid, f_out)

    out = sgc_lr_forward_pallas(x, edge_index, edge_weight, params,
                                K=K, num_hid=num_hid, **fwd_kwargs)
    out = jax.block_until_ready(out)

    ref = sgc_lr_reference(x, edge_index, edge_weight, params,
                           K=K, num_hid=num_hid)
    assert out.shape == (n, f_out), (out.shape, (n, f_out))
    assert jnp.allclose(out, ref, atol=3e-2, rtol=3e-2), (
        "mismatch vs reference", float(jnp.max(jnp.abs(out - ref))))


if __name__ == "__main__":
    key = jax.random.PRNGKey(0)
    k1, k2 = jax.random.split(key)

    # Case 1: resident-H path, multi-step accumulation grid, exact hid padding.
    _run_case(k1, n=384, f_in=16, num_hid=128, f_out=32, K=2, weighted=False)

    # Case 2: streaming-H path (resident budget forced to 0), masked LayerNorm
    # (hid=96 < 128), weighted edges, K=3.
    _run_case(k2, n=200, f_in=10, num_hid=96, f_out=7, K=3, weighted=True,
              resident_h_bytes=0)

    print("KERNEL_OK")
</pallas_src>

<mosaic_0001>
module attributes {stable_mosaic.version = 11 : i64} {
  func.func @_mlp_in_kernel(%arg0: i32, %arg1: memref<256x128xbf16, #tpu.memory_space<vmem>>, %arg2: memref<128x128xbf16, #tpu.memory_space<vmem>>, %arg3: memref<1x128xf32, #tpu.memory_space<vmem>>, %arg4: memref<1x128xf32, #tpu.memory_space<vmem>>, %arg5: memref<1x128xf32, #tpu.memory_space<vmem>>, %arg6: memref<256x128xbf16, #tpu.memory_space<vmem>>) attributes {dimension_semantics = [#tpu.dimension_semantics<parallel>], iteration_bounds = array<i64: 3>, scalar_prefetch = 0 : i64, scratch_operands = 0 : i64, tpu.core_type = #tpu.core_type<tc>, window_params = [{transform_indices = @transform_0, window_bounds = array<i64: 256, 128>}, {pipeline_mode = #tpu.pipeline_mode<synchronous>, transform_indices = @transform_1, window_bounds = array<i64: 128, 128>}, {pipeline_mode = #tpu.pipeline_mode<synchronous>, transform_indices = @transform_2, window_bounds = array<i64: 1, 128>}, {pipeline_mode = #tpu.pipeline_mode<synchronous>, transform_indices = @transform_3, window_bounds = array<i64: 1, 128>}, {pipeline_mode = #tpu.pipeline_mode<synchronous>, transform_indices = @transform_4, window_bounds = array<i64: 1, 128>}, {transform_indices = @transform_5, window_bounds = array<i64: 256, 128>}]} {
    %c0 = arith.constant 0 : index
    %c0_0 = arith.constant 0 : index
    %0 = vector.load %arg1[%c0, %c0_0] : memref<256x128xbf16, #tpu.memory_space<vmem>>, vector<256x128xbf16>
    %c0_1 = arith.constant 0 : index
    %c0_2 = arith.constant 0 : index
    %1 = vector.load %arg2[%c0_1, %c0_2] : memref<128x128xbf16, #tpu.memory_space<vmem>>, vector<128x128xbf16>
    %cst = arith.constant dense<0.000000e+00> : vector<256x128xf32>
    %2 = tpu.matmul %0, %1, %cst {dimension_numbers = #tpu.dot_dimension_numbers<[1], [0], [0], [1], [0, 0, 1, 1], [], []>} : vector<256x128xbf16>, vector<128x128xbf16>, vector<256x128xf32> -> vector<256x128xf32>
    %c0_3 = arith.constant 0 : index
    %c0_4 = arith.constant 0 : index
    %3 = vector.load %arg3[%c0_3, %c0_4] : memref<1x128xf32, #tpu.memory_space<vmem>>, vector<1x128xf32>
    %4 = vector.broadcast %3 : vector<1x128xf32> to vector<256x128xf32>
    %5 = arith.addf %2, %4 : vector<256x128xf32>
    %6 = arith.mulf %5, %5 : vector<256x128xf32>
    %7 = arith.mulf %5, %6 : vector<256x128xf32>
    %cst_5 = arith.constant 4.471500e-02 : f32
    %8 = vector.broadcast %cst_5 : f32 to vector<256x128xf32>
    %9 = arith.mulf %8, %7 : vector<256x128xf32>
    %10 = arith.addf %5, %9 : vector<256x128xf32>
    %cst_6 = arith.constant 0.797884583 : f32
    %11 = vector.broadcast %cst_6 : f32 to vector<256x128xf32>
    %12 = arith.mulf %11, %10 : vector<256x128xf32>
    %13 = math.tanh %12 : vector<256x128xf32>
    %cst_7 = arith.constant 1.000000e+00 : f32
    %14 = vector.broadcast %cst_7 : f32 to vector<256x128xf32>
    %15 = arith.addf %14, %13 : vector<256x128xf32>
    %cst_8 = arith.constant 5.000000e-01 : f32
    %16 = vector.broadcast %cst_8 : f32 to vector<256x128xf32>
    %17 = arith.mulf %16, %15 : vector<256x128xf32>
    %18 = arith.mulf %5, %17 : vector<256x128xf32>
    %c0_9 = arith.constant 0 : index
    %c0_10 = arith.constant 0 : index
    %19 = vector.load %arg4[%c0_9, %c0_10] : memref<1x128xf32, #tpu.memory_space<vmem>>, vector<1x128xf32>
    %c0_11 = arith.constant 0 : index
    %c0_12 = arith.constant 0 : index
    %20 = vector.load %arg5[%c0_11, %c0_12] : memref<1x128xf32, #tpu.memory_space<vmem>>, vector<1x128xf32>
    %cst_13 = arith.constant dense<0.000000e+00> : vector<256xf32>
    %21 = vector.multi_reduction <add>, %18, %cst_13 [1] : vector<256x128xf32> to vector<256xf32>
    %22 = vector.shape_cast %21 : vector<256xf32> to vector<256x1xf32>
    %cst_14 = arith.constant 1.280000e+02 : f32
    %23 = vector.broadcast %cst_14 : f32 to vector<256x1xf32>
    %24 = arith.divf %22, %23 : vector<256x1xf32>
    %25 = vector.broadcast %24 : vector<256x1xf32> to vector<256x128xf32>
    %26 = arith.subf %18, %25 : vector<256x128xf32>
    %27 = arith.mulf %26, %26 : vector<256x128xf32>
    %cst_15 = arith.constant dense<0.000000e+00> : vector<256xf32>
    %28 = vector.multi_reduction <add>, %27, %cst_15 [1] : vector<256x128xf32> to vector<256xf32>
    %29 = vector.shape_cast %28 : vector<256xf32> to vector<256x1xf32>
    %cst_16 = arith.constant 1.280000e+02 : f32
    %30 = vector.broadcast %cst_16 : f32 to vector<256x1xf32>
    %31 = arith.divf %29, %30 : vector<256x1xf32>
    %cst_17 = arith.constant 9.99999974E-6 : f32
    %32 = vector.broadcast %cst_17 : f32 to vector<256x1xf32>
    %33 = arith.addf %31, %32 : vector<256x1xf32>
    %34 = math.rsqrt %33 : vector<256x1xf32>
    %35 = vector.broadcast %34 : vector<256x1xf32> to vector<256x128xf32>
    %36 = arith.mulf %26, %35 : vector<256x128xf32>
    %37 = vector.broadcast %19 : vector<1x128xf32> to vector<256x128xf32>
    %38 = arith.mulf %36, %37 : vector<256x128xf32>
    %39 = vector.broadcast %20 : vector<1x128xf32> to vector<256x128xf32>
    %40 = arith.addf %38, %39 : vector<256x128xf32>
    %41 = arith.truncf %40 : vector<256x128xf32> to vector<256x128xbf16>
    %c0_18 = arith.constant 0 : index
    %c0_19 = arith.constant 0 : index
    %42 = vector.load %arg6[%c0_18, %c0_19] : memref<256x128xbf16, #tpu.memory_space<vmem>>, vector<256x128xbf16>
    tpu.vector_store %arg6[%c0_18, %c0_19], %41 {strides = array<i32>} : memref<256x128xbf16, #tpu.memory_space<vmem>>, vector<256x128xbf16>,
    return
  }
  func.func @transform_0(%arg0: i32) -> (i32, i32) {
    %c0_i32 = arith.constant 0 : i32
    %c0_i32_0 = arith.constant 0 : i32
    return %arg0, %c0_i32 : i32, i32
  }
  func.func @transform_1(%arg0: i32) -> (i32, i32) {
    %c0_i32 = arith.constant 0 : i32
    %c0_i32_0 = arith.constant 0 : i32
    %c0_i32_1 = arith.constant 0 : i32
    return %c0_i32, %c0_i32_0 : i32, i32
  }
  func.func @transform_2(%arg0: i32) -> (i32, i32) {
    %c0_i32 = arith.constant 0 : i32
    %c0_i32_0 = arith.constant 0 : i32
    %c0_i32_1 = arith.constant 0 : i32
    return %c0_i32, %c0_i32_0 : i32, i32
  }
  func.func @transform_3(%arg0: i32) -> (i32, i32) {
    %c0_i32 = arith.constant 0 : i32
    %c0_i32_0 = arith.constant 0 : i32
    %c0_i32_1 = arith.constant 0 : i32
    return %c0_i32, %c0_i32_0 : i32, i32
  }
  func.func @transform_4(%arg0: i32) -> (i32, i32) {
    %c0_i32 = arith.constant 0 : i32
    %c0_i32_0 = arith.constant 0 : i32
    %c0_i32_1 = arith.constant 0 : i32
    return %c0_i32, %c0_i32_0 : i32, i32
  }
  func.func @transform_5(%arg0: i32) -> (i32, i32) {
    %c0_i32 = arith.constant 0 : i32
    %c0_i32_0 = arith.constant 0 : i32
    return %arg0, %c0_i32 : i32, i32
  }
}

</mosaic_0001>

<llo_original>
// kernel: tpu_custom_call.1
$region0: #{tpu_custom_call.1}
  #allocation0 [shape = 'u32[]', space=smem, size = 0x4, offset = 0x4, fixed_abs, tag = 'smem constant byte address 0x4 - core index']
  #allocation1 [shape = 'u32[72,128]{1,0:T(1,128)}', space=vmem, size = 0x9000, scoped, tag = 'internal scratch']
  %s0 = inlined_call_operand.hbm [shape: bf16[768,128], index: 0, kind: input, shape index: {}]
  %s1 = inlined_call_operand.hbm [shape: bf16[128,128], index: 1, kind: input, shape index: {}]
  %s2 = inlined_call_operand.vmem [shape: f32[1,128], index: 2, kind: input, shape index: {}]
  %s3 = inlined_call_operand.vmem [shape: f32[1,128], index: 3, kind: input, shape index: {}]
  %s4 = inlined_call_operand.vmem [shape: f32[1,128], index: 4, kind: input, shape index: {}]
  %s5 = inlined_call_operand.hbm [shape: bf16[768,128], index: 5, kind: output, shape index: {}]
  %s6 = sld [smem:[#allocation0]]
  $region61: #{tpu_custom_call.1} parent=0
    _
  %s8 = ssub.s32 1, %s6
  %s9 = scalar_select 0, %s8, %s6
  $region1: #{tpu_custom_call.1} parent=0
    #allocation2 [shape = 'u8[131072]{0}', space=vmem, size = 0x20000, scoped, tag = 'input window, operand 0']
    #allocation3 [shape = 's32[2]{0}', space=sflag, size = 0x8, scoped, tag = 'scoped memory for tpu_custom_call.1']
    #allocation4 [shape = 's32[2]{0}', space=sflag, size = 0x8, scoped, tag = 'scoped memory for tpu_custom_call.1']
    #allocation5 [shape = 'u8[32768]{0}', space=vmem, size = 0x8000, scoped, tag = 'input window, operand 1, single buffered']
    #allocation6 [shape = 's32[1]{0}', space=sflag, size = 0x4, scoped, tag = 'scoped memory for tpu_custom_call.1']
    #allocation7 [shape = 'u8[131072]{0}', space=vmem, size = 0x20000, scoped, tag = 'output window, operand 0']
    %10 = vsyncpa [#allocation3], 0
    %s11 = scalar_lea.sflag [#allocation3], 1
    %12 = vsyncpa %s11, 0
    %13 = vsyncpa [#allocation6], 0
    %14 = vsyncpa [#allocation4], 0
    %s15 = scalar_lea.sflag [#allocation4], 1
    %16 = vsyncpa %s15, 0
    loop: start=0, step=1, limit=5
    $region2: #{tpu_custom_call.1} parent=1 // loop_pre_header
      _
    $region3: #{tpu_custom_call.1} parent=1 // loop_header
      %s18 = sphi 0, %s22
      %p19 = scmp.ge.s32.totalorder %s18, 5
      %s28 = sphi 0, %s30
      %s31 = sphi 0, %s28
      %s32 = sphi 0, %s31
      %s48 = sphi 0, %s32
      %s52 = sphi 0, %s52
      %s54 = sphi 0, %s52
      %s55 = sphi 0, %s54
      %s69 = sphi 0, %s55
      %s73 = sphi 0, %s73
      %s75 = sphi 0, %s73
      %s76 = sphi 0, %s75
      %s90 = sphi 0, %s76
      %s94 = sphi 0, %s94
      %s96 = sphi 0, %s94
      %s97 = sphi 0, %s96
      %s111 = sphi 0, %s97
      %s115 = sphi 0, %s115
      %s117 = sphi 0, %s115
      %s118 = sphi 0, %s117
      %s132 = sphi 0, %s118
      %s138 = sphi 0, %s140
      %s141 = sphi 0, %s138
      %s142 = sphi 0, %s141
      %s158 = sphi 0, %s142
    $region4: #{tpu_custom_call.1} parent=1 // loop_header_branch
      %21 = sbr.rel (%p19) target = $region8
    $region5: #{tpu_custom_call.1} parent=1 // loop_body
      %s23 = ssub.s32 %s18, 1
      %s24 = ssub.s32 %s18, 2
      %s25 = sadd.s32 %s18, 1
      %s26 = ssub.s32 %s18, %s25
      %p27 = scmp.eq.s32.totalorder %s26, 0
      %s29 = sadd.s32 %s28, 1
      %s30 = scalar_select %p27, %s28, %s29
      %p33 = pneg %p27
      %p34 = scmp.eq.s32.totalorder %s18, 2
      %p35 = por %p33, %p34
      %p36 = scmp.ne.s32.totalorder %s28, %s31
      %p37 = scmp.eq.s32.totalorder %s18, 0
      %p38 = por %p36, %p37
      %p39 = scmp.ne.s32.totalorder %s28, %s31
      %p40 = scmp.eq.s32.totalorder %s23, 2
      %p41 = por %p39, %p40
      %p42 = scmp.ne.s32.totalorder %s31, %s32
      %p43 = scmp.eq.s32.totalorder %s23, 0
      %p44 = por %p42, %p43
      %p45 = scmp.ne.s32.totalorder %s31, %s32
      %p46 = scmp.eq.s32.totalorder %s24, 2
      %p47 = por %p45, %p46
      %p49 = scmp.ne.s32.totalorder %s32, %s48
      %p50 = scmp.eq.s32.totalorder %s24, 0
      %p51 = por %p49, %p50
      %s53 = sadd.s32 %s52, 1
      %p56 = scmp.eq.s32.totalorder %s18, 2
      %p57 = scmp.ne.s32.totalorder %s52, %s54
      %p58 = scmp.eq.s32.totalorder %s18, 0
      %p59 = por %p57, %p58
      %p60 = scmp.ne.s32.totalorder %s52, %s54
      %p61 = scmp.eq.s32.totalorder %s23, 2
      %p62 = por %p60, %p61
      %p63 = scmp.ne.s32.totalorder %s54, %s55
      %p64 = scmp.eq.s32.totalorder %s23, 0
      %p65 = por %p63, %p64
      %p66 = scmp.ne.s32.totalorder %s54, %s55
      %p67 = scmp.eq.s32.totalorder %s24, 2
      %p68 = por %p66, %p67
      %p70 = scmp.ne.s32.totalorder %s55, %s69
      %p71 = scmp.eq.s32.totalorder %s24, 0
      %p72 = por %p70, %p71
      %s74 = sadd.s32 %s73, 1
      %p77 = scmp.eq.s32.totalorder %s18, 2
      %p78 = scmp.ne.s32.totalorder %s73, %s75
      %p79 = scmp.eq.s32.totalorder %s18, 0
      %p80 = por %p78, %p79
      %p81 = scmp.ne.s32.totalorder %s73, %s75
      %p82 = scmp.eq.s32.totalorder %s23, 2
      %p83 = por %p81, %p82
      %p84 = scmp.ne.s32.totalorder %s75, %s76
      %p85 = scmp.eq.s32.totalorder %s23, 0
      %p86 = por %p84, %p85
      %p87 = scmp.ne.s32.totalorder %s75, %s76
      %p88 = scmp.eq.s32.totalorder %s24, 2
      %p89 = por %p87, %p88
      %p91 = scmp.ne.s32.totalorder %s76, %s90
      %p92 = scmp.eq.s32.totalorder %s24, 0
      %p93 = por %p91, %p92
      %s95 = sadd.s32 %s94, 1
      %p98 = scmp.eq.s32.totalorder %s18, 2
      %p99 = scmp.ne.s32.totalorder %s94, %s96
      %p100 = scmp.eq.s32.totalorder %s18, 0
      %p101 = por %p99, %p100
      %p102 = scmp.ne.s32.totalorder %s94, %s96
      %p103 = scmp.eq.s32.totalorder %s23, 2
      %p104 = por %p102, %p103
      %p105 = scmp.ne.s32.totalorder %s96, %s97
      %p106 = scmp.eq.s32.totalorder %s23, 0
      %p107 = por %p105, %p106
      %p108 = scmp.ne.s32.totalorder %s96, %s97
      %p109 = scmp.eq.s32.totalorder %s24, 2
      %p110 = por %p108, %p109
      %p112 = scmp.ne.s32.totalorder %s97, %s111
      %p113 = scmp.eq.s32.totalorder %s24, 0
      %p114 = por %p112, %p113
      %s116 = sadd.s32 %s115, 1
      %p119 = scmp.eq.s32.totalorder %s18, 2
      %p120 = scmp.ne.s32.totalorder %s115, %s117
      %p121 = scmp.eq.s32.totalorder %s18, 0
      %p122 = por %p120, %p121
      %p123 = scmp.ne.s32.totalorder %s115, %s117
      %p124 = scmp.eq.s32.totalorder %s23, 2
      %p125 = por %p123, %p124
      %p126 = scmp.ne.s32.totalorder %s117, %s118
      %p127 = scmp.eq.s32.totalorder %s23, 0
      %p128 = por %p126, %p127
      %p129 = scmp.ne.s32.totalorder %s117, %s118
      %p130 = scmp.eq.s32.totalorder %s24, 2
      %p131 = por %p129, %p130
      %p133 = scmp.ne.s32.totalorder %s118, %s132
      %p134 = scmp.eq.s32.totalorder %s24, 0
      %p135 = por %p133, %p134
      %s136 = ssub.s32 %s18, %s25
      %p137 = scmp.eq.s32.totalorder %s136, 0
      %s139 = sadd.s32 %s138, 1
      %s140 = scalar_select %p137, %s138, %s139
      %p143 = pneg %p137
      %p144 = scmp.eq.s32.totalorder %s18, 2
      %p145 = por %p143, %p144
      %p146 = scmp.ne.s32.totalorder %s138, %s141
      %p147 = scmp.eq.s32.totalorder %s18, 0
      %p148 = por %p146, %p147
      %p149 = scmp.ne.s32.totalorder %s138, %s141
      %p150 = scmp.eq.s32.totalorder %s23, 2
      %p151 = por %p149, %p150
      %p152 = scmp.ne.s32.totalorder %s141, %s142
      %p153 = scmp.eq.s32.totalorder %s23, 0
      %p154 = por %p152, %p153
      %p155 = scmp.ne.s32.totalorder %s141, %s142
      %p156 = scmp.eq.s32.totalorder %s24, 2
      %p157 = por %p155, %p156
      %p159 = scmp.ne.s32.totalorder %s142, %s158
      %p160 = scmp.eq.s32.totalorder %s24, 0
      %p161 = por %p159, %p160
      %p162 = scmp.le.s32.totalorder 1, %s18
      %p163 = scmp.lt.s32.totalorder %s18, 4
      %p164 = pnand %p162, %p163
      %p165 = pneg %p164
      // Predicated region
      $region9: #{tpu_custom_call.1} parent=5 // pred_check
        _
      $region10: #{tpu_custom_call.1} parent=5 // pred_check_branch
        %167 = sbr.rel (%p164) target = $region12
      $region11: #{tpu_custom_call.1} parent=5 // pred_region
        %s168 = ssub.s32 %s18, 1
        // Predicated region
        $region13: #{tpu_custom_call.1} parent=11 // pred_check
          %p169 = pneg %p65
        $region14: #{tpu_custom_call.1} parent=11 // pred_check_branch
          %171 = sbr.rel (%p169) target = $region16
        $region15: #{tpu_custom_call.1} parent=11 // pred_region
          %173 = vsyncadd [#allocation6], 0
          %s174 = sshll.u32 %s1, 4
          %s175 = int_to_ptr.hbm [resolvable:$true] %s174
          %s176 = sshll.u32 [#allocation5], 4
          %s177 = int_to_ptr.vmem [resolvable:$true] %s176
          %182 = dma.hbm_to_vmem [thread:$0]  %s175, 1024, %s177, [#allocation6], 64, 64, 4
        $region16: #{tpu_custom_call.1} parent=11 // pred_fallthru
          _
        // Predicated region
        $region17: #{tpu_custom_call.1} parent=11 // pred_check
          %p183 = pneg %p86
        $region18: #{tpu_custom_call.1} parent=11 // pred_check_branch
          %185 = sbr.rel (%p183) target = $region20
        $region19: #{tpu_custom_call.1} parent=11 // pred_region
          _
        $region20: #{tpu_custom_call.1} parent=11 // pred_fallthru
          _
        // Predicated region
        $region21: #{tpu_custom_call.1} parent=11 // pred_check
          %p186 = pneg %p107
        $region22: #{tpu_custom_call.1} parent=11 // pred_check_branch
          %188 = sbr.rel (%p186) target = $region24
        $region23: #{tpu_custom_call.1} parent=11 // pred_region
          _
        $region24: #{tpu_custom_call.1} parent=11 // pred_fallthru
          _
        // Predicated region
        $region25: #{tpu_custom_call.1} parent=11 // pred_check
          %p189 = pneg %p128
        $region26: #{tpu_custom_call.1} parent=11 // pred_check_branch
          %191 = sbr.rel (%p189) target = $region28
        $region27: #{tpu_custom_call.1} parent=11 // pred_region
          _
        $region28: #{tpu_custom_call.1} parent=11 // pred_fallthru
          _
      $region12: #{tpu_custom_call.1} parent=5 // pred_fallthru
        _
      %p192 = scmp.lt.s32.totalorder %s18, 3
      // Predicated region
      $region29: #{tpu_custom_call.1} parent=5 // pred_check
        %p193 = pneg %p192
      $region30: #{tpu_custom_call.1} parent=5 // pred_check_branch
        %195 = sbr.rel (%p193) target = $region32
      $region31: #{tpu_custom_call.1} parent=5 // pred_region
        // Predicated region
        $region33: #{tpu_custom_call.1} parent=31 // pred_check
          %p196 = pneg %p38
        $region34: #{tpu_custom_call.1} parent=31 // pred_check_branch
          %198 = sbr.rel (%p196) target = $region36
        $region35: #{tpu_custom_call.1} parent=31 // pred_region
          %s199 = sand.u32 %s28, 1
          %s200 = scalar_lea.sflag [#allocation3], %s199
          %s201 = sand.u32 %s28, 1
          %s202 = smul.addr %s201, 128
          %s203 = scalar_lea.vmem [#allocation2], %s202
          %s204 = smul.u32 32, %s18
          %206 = vsyncadd %s200, 0
          %s207 = smul.addr %s204, 4
          %s208 = scalar_lea.hbm %s0, %s207
          %s209 = sshll.u32 %s208, 4
          %s210 = int_to_ptr.hbm [resolvable:$true] %s209
          %s211 = sshll.u32 %s203, 4
          %s212 = int_to_ptr.vmem [resolvable:$true] %s211
          %217 = dma.hbm_to_vmem [thread:$0]  %s210, 2048, %s212, %s200, 64, 64, 4
        $region36: #{tpu_custom_call.1} parent=31 // pred_fallthru
          _
      $region32: #{tpu_custom_call.1} parent=5 // pred_fallthru
        _
      %p218 = scmp.le.s32.totalorder 1, %s18
      %p219 = scmp.lt.s32.totalorder %s18, 4
      %p220 = pnand %p218, %p219
      %p221 = pneg %p220
      // Predicated region
      $region37: #{tpu_custom_call.1} parent=5 // pred_check
        _
      $region38: #{tpu_custom_call.1} parent=5 // pred_check_branch
        %223 = sbr.rel (%p220) target = $region40
      $region39: #{tpu_custom_call.1} parent=5 // pred_region
        %s224 = ssub.s32 %s18, 1
        %s225 = sand.u32 %s31, 1
        %s226 = scalar_lea.sflag [#allocation3], %s225
        %s227 = sand.u32 %s31, 1
        %s228 = smul.addr %s227, 128
        %s229 = scalar_lea.vmem [#allocation2], %s228
        // Predicated region
        $region41: #{tpu_custom_call.1} parent=39 // pred_check
          %p230 = pneg %p44
        $region42: #{tpu_custom_call.1} parent=39 // pred_check_branch
          %232 = sbr.rel (%p230) target = $region44
        $region43: #{tpu_custom_call.1} parent=39 // pred_region
          %234 = dma.done %s226, 2048
        $region44: #{tpu_custom_call.1} parent=39 // pred_fallthru
          _
        // Predicated region
        $region45: #{tpu_custom_call.1} parent=39 // pred_check
          %p235 = pneg %p65
        $region46: #{tpu_custom_call.1} parent=39 // pred_check_branch
          %237 = sbr.rel (%p235) target = $region48
        $region47: #{tpu_custom_call.1} parent=39 // pred_region
          %239 = dma.done [#allocation6], 1024
        $region48: #{tpu_custom_call.1} parent=39 // pred_fallthru
          _
        %s240 = sand.u32 %s31, 1
        %s241 = scalar_lea.sflag [#allocation3], %s240
        %s242 = sand.u32 %s31, 1
        %s243 = smul.addr %s242, 128
        %s244 = scalar_lea.vmem [#allocation2], %s243
        %p245 = pneg %p44
        %p246 = pneg %p41
        %p247 = pneg %p65
        %p248 = pneg %p62
        %p249 = pneg %p86
        %p250 = pneg %p83
        %p251 = pneg %p107
        %p252 = pneg %p104
        %p253 = pneg %p128
        %p254 = pneg %p125
        %p255 = pneg %p154
        %p256 = pneg %p151
        %s257 = sand.u32 %s141, 1
        %s258 = scalar_lea.sflag [#allocation4], %s257
        %s259 = sand.u32 %s141, 1
        %s260 = smul.addr %s259, 128
        %s261 = scalar_lea.vmem [#allocation7], %s260
        %s262 = smul.u32 32, %s23
        %s263 = smul.u32 32, %s23
        %v264 = vld [vmem:[%s229] sm:$0xf]
        %v265 = vld [vmem:[%s229 + $0x4] sm:$0xf]
        %v266 = vld [vmem:[%s229 + $0x8] sm:$0xf]
        %v267 = vld [vmem:[%s229 + $0xc] sm:$0xf]
        %v268 = vld [vmem:[%s229 + $0x10] sm:$0xf]
        %v269 = vld [vmem:[%s229 + $0x14] sm:$0xf]
        %v270 = vld [vmem:[%s229 + $0x18] sm:$0xf]
        %v271 = vld [vmem:[%s229 + $0x1c] sm:$0xf]
        %v272 = vld [vmem:[%s229 + $0x20] sm:$0xf]
        %v273 = vld [vmem:[%s229 + $0x24] sm:$0xf]
        %v274 = vld [vmem:[%s229 + $0x28] sm:$0xf]
        %v275 = vld [vmem:[%s229 + $0x2c] sm:$0xf]
        %v276 = vld [vmem:[%s229 + $0x30] sm:$0xf]
        %v277 = vld [vmem:[%s229 + $0x34] sm:$0xf]
        %v278 = vld [vmem:[%s229 + $0x38] sm:$0xf]
        %v279 = vld [vmem:[%s229 + $0x3c] sm:$0xf]
        %v280 = vld [vmem:[%s229 + $0x40] sm:$0xf]
        %v281 = vld [vmem:[%s229 + $0x44] sm:$0xf]
        %v282 = vld [vmem:[%s229 + $0x48] sm:$0xf]
        %v283 = vld [vmem:[%s229 + $0x4c] sm:$0xf]
        %v284 = vld [vmem:[%s229 + $0x50] sm:$0xf]
        %v285 = vld [vmem:[%s229 + $0x54] sm:$0xf]
        %v286 = vld [vmem:[%s229 + $0x58] sm:$0xf]
        %v287 = vld [vmem:[%s229 + $0x5c] sm:$0xf]
        %v288 = vld [vmem:[%s229 + $0x60] sm:$0xf]
        %v289 = vld [vmem:[%s229 + $0x64] sm:$0xf]
        %v290 = vld [vmem:[%s229 + $0x68] sm:$0xf]
        %v291 = vld [vmem:[%s229 + $0x6c] sm:$0xf]
        %v292 = vld [vmem:[%s229 + $0x70] sm:$0xf]
        %v293 = vld [vmem:[%s229 + $0x74] sm:$0xf]
        %v294 = vld [vmem:[%s229 + $0x78] sm:$0xf]
        %v295 = vld [vmem:[%s229 + $0x7c] sm:$0xf]
        %v296 = vld [vmem:[#allocation5] sm:$0xf]
        %v297 = vld [vmem:[#allocation5 + $0x4] sm:$0xf]
        %v298 = vld [vmem:[#allocation5 + $0x8] sm:$0xf]
        %v299 = vld [vmem:[#allocation5 + $0xc] sm:$0xf]
        %v300 = vld [vmem:[#allocation5 + $0x10] sm:$0xf]
        %v301 = vld [vmem:[#allocation5 + $0x14] sm:$0xf]
        %v302 = vld [vmem:[#allocation5 + $0x18] sm:$0xf]
        %v303 = vld [vmem:[#allocation5 + $0x1c] sm:$0xf]
        %v304 = vld [vmem:[#allocation5 + $0x20] sm:$0xf]
        %v305 = vld [vmem:[#allocation5 + $0x24] sm:$0xf]
        %v306 = vld [vmem:[#allocation5 + $0x28] sm:$0xf]
        %v307 = vld [vmem:[#allocation5 + $0x2c] sm:$0xf]
        %v308 = vld [vmem:[#allocation5 + $0x30] sm:$0xf]
        %v309 = vld [vmem:[#allocation5 + $0x34] sm:$0xf]
        %v310 = vld [vmem:[#allocation5 + $0x38] sm:$0xf]
        %v311 = vld [vmem:[#allocation5 + $0x3c] sm:$0xf]
        %v312 = vld [vmem:[%s2] sm:$0x1]
        %v314 = vperm.slane %v312, 0
        %v348 = vunpack.c.l.b16 %v264
        %v349 = vunpack.c.l.b16 %v265
        %v350 = vunpack.c.l.b16 %v266
        %v351 = vunpack.c.l.b16 %v267
        %v352 = vunpack.c.l.b16 %v268
        %v353 = vunpack.c.l.b16 %v269
        %v354 = vunpack.c.l.b16 %v270
        %v355 = vunpack.c.l.b16 %v271
        %v356 = vunpack.c.l.b16 %v272
        %v357 = vunpack.c.l.b16 %v273
        %v358 = vunpack.c.l.b16 %v274
        %v359 = vunpack.c.l.b16 %v275
        %v360 = vunpack.c.l.b16 %v276
        %v361 = vunpack.c.l.b16 %v277
        %v362 = vunpack.c.l.b16 %v278
        %v363 = vunpack.c.l.b16 %v279
        %v364 = vunpack.c.l.b16 %v280
        %v365 = vunpack.c.l.b16 %v281
        %v366 = vunpack.c.l.b16 %v282
        %v367 = vunpack.c.l.b16 %v283
        %v368 = vunpack.c.l.b16 %v284
        %v369 = vunpack.c.l.b16 %v285
        %v370 = vunpack.c.l.b16 %v286
        %v371 = vunpack.c.l.b16 %v287
        %v372 = vunpack.c.l.b16 %v288
        %v373 = vunpack.c.l.b16 %v289
        %v374 = vunpack.c.l.b16 %v290
        %v375 = vunpack.c.l.b16 %v291
        %v376 = vunpack.c.l.b16 %v292
        %v377 = vunpack.c.l.b16 %v293
        %v378 = vunpack.c.l.b16 %v294
        %v379 = vunpack.c.l.b16 %v295
        %v380 = vpack.c.b16 %v349, %v348
        %v381 = vpack.c.b16 %v351, %v350
        %v382 = vpack.c.b16 %v353, %v352
        %v383 = vpack.c.b16 %v355, %v354
        %v384 = vpack.c.b16 %v357, %v356
        %v385 = vpack.c.b16 %v359, %v358
        %v386 = vpack.c.b16 %v361, %v360
        %v387 = vpack.c.b16 %v363, %v362
        %v388 = vpack.c.b16 %v365, %v364
        %v389 = vpack.c.b16 %v367, %v366
        %v390 = vpack.c.b16 %v369, %v368
        %v391 = vpack.c.b16 %v371, %v370
        %v392 = vpack.c.b16 %v373, %v372
        %v393 = vpack.c.b16 %v375, %v374
        %v394 = vpack.c.b16 %v377, %v376
        %v395 = vpack.c.b16 %v379, %v378
        %v428 = vunpack.c.l.b16 %v296
        %v429 = vunpack.c.l.b16 %v297
        %v430 = vunpack.c.l.b16 %v298
        %v431 = vunpack.c.l.b16 %v299
        %v432 = vunpack.c.l.b16 %v300
        %v433 = vunpack.c.l.b16 %v301
        %v434 = vunpack.c.l.b16 %v302
        %v435 = vunpack.c.l.b16 %v303
        %v436 = vunpack.c.l.b16 %v304
        %v437 = vunpack.c.l.b16 %v305
        %v438 = vunpack.c.l.b16 %v306
        %v439 = vunpack.c.l.b16 %v307
        %v440 = vunpack.c.l.b16 %v308
        %v441 = vunpack.c.l.b16 %v309
        %v442 = vunpack.c.l.b16 %v310
        %v443 = vunpack.c.l.b16 %v311
        %v444 = vpack.c.b16 %v429, %v428
        %v445 = vpack.c.b16 %v431, %v430
        %v446 = vpack.c.b16 %v433, %v432
        %v447 = vpack.c.b16 %v435, %v434
        %v448 = vpack.c.b16 %v437, %v436
        %v449 = vpack.c.b16 %v439, %v438
        %v450 = vpack.c.b16 %v441, %v440
        %v451 = vpack.c.b16 %v443, %v442
        %460 = vmatpush.bf16.msra.mxu0 %v451
        %461 = vmatpush.bf16.msra.mxu0 %v450
        %462 = vmatpush.bf16.msra.mxu0 %v449
        %463 = vmatpush.bf16.msra.mxu0 %v448
        %464 = vmatpush.bf16.msra.mxu0 %v447
        %465 = vmatpush.bf16.msra.mxu0 %v446
        %466 = vmatpush.bf16.msra.mxu0 %v445
        %467 = vmatpush.bf16.msra.mxu0 %v444
        %468 = vmatmul.bf16.gmra.mxu0 %v380
        %v469 = vpop.f32.mrf.mxu0
        %v470 = vadd.f32 %v314, %v469
        %v471 = vpop.f32.mrf.mxu0
        %v472 = vadd.f32 %v314, %v471
        %473 = vmatmul.bf16.gmra.mxu0 %v381
        %v474 = vpop.f32.mrf.mxu0
        %v475 = vadd.f32 %v314, %v474
        %v476 = vpop.f32.mrf.mxu0
        %v477 = vadd.f32 %v314, %v476
        %478 = vmatmul.bf16.gmra.mxu0 %v382
        %v479 = vpop.f32.mrf.mxu0
        %v480 = vadd.f32 %v314, %v479
        %v481 = vpop.f32.mrf.mxu0
        %v482 = vadd.f32 %v314, %v481
        %483 = vmatmul.bf16.gmra.mxu0 %v383
        %v484 = vpop.f32.mrf.mxu0
        %v485 = vadd.f32 %v314, %v484
        %v486 = vpop.f32.mrf.mxu0
        %v487 = vadd.f32 %v314, %v486
        %488 = vmatmul.bf16.gmra.mxu0 %v384
        %v489 = vpop.f32.mrf.mxu0
        %v490 = vadd.f32 %v314, %v489
        %v491 = vpop.f32.mrf.mxu0
        %v492 = vadd.f32 %v314, %v491
        %493 = vmatmul.bf16.gmra.mxu0 %v385
        %v494 = vpop.f32.mrf.mxu0
        %v495 = vadd.f32 %v314, %v494
        %v496 = vpop.f32.mrf.mxu0
        %v497 = vadd.f32 %v314, %v496
        %498 = vmatmul.bf16.gmra.mxu0 %v386
        %v499 = vpop.f32.mrf.mxu0
        %v500 = vadd.f32 %v314, %v499
        %v501 = vpop.f32.mrf.mxu0
        %v502 = vadd.f32 %v314, %v501
        %503 = vmatmul.bf16.gmra.mxu0 %v387
        %v504 = vpop.f32.mrf.mxu0
        %v505 = vadd.f32 %v314, %v504
        %v506 = vpop.f32.mrf.mxu0
        %v507 = vadd.f32 %v314, %v506
        %508 = vmatmul.bf16.gmra.mxu0 %v388
        %v509 = vpop.f32.mrf.mxu0
        %v510 = vadd.f32 %v314, %v509
        %v511 = vpop.f32.mrf.mxu0
        %v512 = vadd.f32 %v314, %v511
        %513 = vmatmul.bf16.gmra.mxu0 %v389
        %v514 = vpop.f32.mrf.mxu0
        %v515 = vadd.f32 %v314, %v514
        %v516 = vpop.f32.mrf.mxu0
        %v517 = vadd.f32 %v314, %v516
        %518 = vmatmul.bf16.gmra.mxu0 %v390
        %v519 = vpop.f32.mrf.mxu0
        %v520 = vadd.f32 %v314, %v519
        %v521 = vpop.f32.mrf.mxu0
        %v522 = vadd.f32 %v314, %v521
        %523 = vmatmul.bf16.gmra.mxu0 %v391
        %v524 = vpop.f32.mrf.mxu0
        %v525 = vadd.f32 %v314, %v524
        %v526 = vpop.f32.mrf.mxu0
        %v527 = vadd.f32 %v314, %v526
        %528 = vmatmul.bf16.gmra.mxu0 %v392
        %v529 = vpop.f32.mrf.mxu0
        %v530 = vadd.f32 %v314, %v529
        %v531 = vpop.f32.mrf.mxu0
        %v532 = vadd.f32 %v314, %v531
        %533 = vmatmul.bf16.gmra.mxu0 %v393
        %v534 = vpop.f32.mrf.mxu0
        %v535 = vadd.f32 %v314, %v534
        %v536 = vpop.f32.mrf.mxu0
        %v537 = vadd.f32 %v314, %v536
        %538 = vmatmul.bf16.gmra.mxu0 %v394
        %v539 = vpop.f32.mrf.mxu0
        %v540 = vadd.f32 %v314, %v539
        %v541 = vpop.f32.mrf.mxu0
        %v542 = vadd.f32 %v314, %v541
        %543 = vmatmul.bf16.gmra.mxu0 %v395
        %v544 = vpop.f32.mrf.mxu0
        %v545 = vadd.f32 %v314, %v544
        %v546 = vpop.f32.mrf.mxu0
        %v547 = vadd.f32 %v314, %v546
        %548 = vdwg.mxu0
        %v549 = vmul.f32 %v470, %v470
        %v550 = vmul.f32 %v472, %v472
        %v551 = vmul.f32 %v475, %v475
        %v552 = vmul.f32 %v477, %v477
        %v553 = vmul.f32 %v480, %v480
        %v554 = vmul.f32 %v482, %v482
        %v555 = vmul.f32 %v485, %v485
        %v556 = vmul.f32 %v487, %v487
        %v557 = vmul.f32 %v490, %v490
        %v558 = vmul.f32 %v492, %v492
        %v559 = vmul.f32 %v495, %v495
        %v560 = vmul.f32 %v497, %v497
        %v561 = vmul.f32 %v500, %v500
        %v562 = vmul.f32 %v502, %v502
        %v563 = vmul.f32 %v505, %v505
        %v564 = vmul.f32 %v507, %v507
        %v565 = vmul.f32 %v510, %v510
        %v566 = vmul.f32 %v512, %v512
        %v567 = vmul.f32 %v515, %v515
        %v568 = vmul.f32 %v517, %v517
        %v569 = vmul.f32 %v520, %v520
        %v570 = vmul.f32 %v522, %v522
        %v571 = vmul.f32 %v525, %v525
        %v572 = vmul.f32 %v527, %v527
        %v573 = vmul.f32 %v530, %v530
        %v574 = vmul.f32 %v532, %v532
        %v575 = vmul.f32 %v535, %v535
        %v576 = vmul.f32 %v537, %v537
        %v577 = vmul.f32 %v540, %v540
        %v578 = vmul.f32 %v542, %v542
        %v579 = vmul.f32 %v545, %v545
        %v580 = vmul.f32 %v547, %v547
        %v581 = vmul.f32 %v470, %v549
        %v582 = vmul.f32 %v472, %v550
        %v583 = vmul.f32 %v475, %v551
        %v584 = vmul.f32 %v477, %v552
        %v585 = vmul.f32 %v480, %v553
        %v586 = vmul.f32 %v482, %v554
        %v587 = vmul.f32 %v485, %v555
        %v588 = vmul.f32 %v487, %v556
        %v589 = vmul.f32 %v490, %v557
        %v590 = vmul.f32 %v492, %v558
        %v591 = vmul.f32 %v495, %v559
        %v592 = vmul.f32 %v497, %v560
        %v593 = vmul.f32 %v500, %v561
        %v594 = vmul.f32 %v502, %v562
        %v595 = vmul.f32 %v505, %v563
        %v596 = vmul.f32 %v507, %v564
        %v597 = vmul.f32 %v510, %v565
        %v598 = vmul.f32 %v512, %v566
        %v599 = vmul.f32 %v515, %v567
        %v600 = vmul.f32 %v517, %v568
        %v601 = vmul.f32 %v520, %v569
        %v602 = vmul.f32 %v522, %v570
        %v603 = vmul.f32 %v525, %v571
        %v604 = vmul.f32 %v527, %v572
        %v605 = vmul.f32 %v530, %v573
        %v606 = vmul.f32 %v532, %v574
        %v607 = vmul.f32 %v535, %v575
        %v608 = vmul.f32 %v537, %v576
        %v609 = vmul.f32 %v540, %v577
        %v610 = vmul.f32 %v542, %v578
        %v611 = vmul.f32 %v545, %v579
        %v612 = vmul.f32 %v547, %v580
        %v613 = vmul.f32 %v581, 0.044715
        %v614 = vmul.f32 %v582, 0.044715
        %v615 = vmul.f32 %v583, 0.044715
        %v616 = vmul.f32 %v584, 0.044715
        %v617 = vmul.f32 %v585, 0.044715
        %v618 = vmul.f32 %v586, 0.044715
        %v619 = vmul.f32 %v587, 0.044715
        %v620 = vmul.f32 %v588, 0.044715
        %v621 = vmul.f32 %v589, 0.044715
        %v622 = vmul.f32 %v590, 0.044715
        %v623 = vmul.f32 %v591, 0.044715
        %v624 = vmul.f32 %v592, 0.044715
        %v625 = vmul.f32 %v593, 0.044715
        %v626 = vmul.f32 %v594, 0.044715
        %v627 = vmul.f32 %v595, 0.044715
        %v628 = vmul.f32 %v596, 0.044715
        %v629 = vmul.f32 %v597, 0.044715
        %v630 = vmul.f32 %v598, 0.044715
        %v631 = vmul.f32 %v599, 0.044715
        %v632 = vmul.f32 %v600, 0.044715
        %v633 = vmul.f32 %v601, 0.044715
        %v634 = vmul.f32 %v602, 0.044715
        %v635 = vmul.f32 %v603, 0.044715
        %v636 = vmul.f32 %v604, 0.044715
        %v637 = vmul.f32 %v605, 0.044715
        %v638 = vmul.f32 %v606, 0.044715
        %v639 = vmul.f32 %v607, 0.044715
        %v640 = vmul.f32 %v608, 0.044715
        %v641 = vmul.f32 %v609, 0.044715
        %v642 = vmul.f32 %v610, 0.044715
        %v643 = vmul.f32 %v611, 0.044715
        %v644 = vmul.f32 %v612, 0.044715
        %v645 = vadd.f32 %v470, %v613
        %v646 = vadd.f32 %v472, %v614
        %v647 = vadd.f32 %v475, %v615
        %v648 = vadd.f32 %v477, %v616
        %v649 = vadd.f32 %v480, %v617
        %v650 = vadd.f32 %v482, %v618
        %v651 = vadd.f32 %v485, %v619
        %v652 = vadd.f32 %v487, %v620
        %v653 = vadd.f32 %v490, %v621
        %v654 = vadd.f32 %v492, %v622
        %v655 = vadd.f32 %v495, %v623
        %v656 = vadd.f32 %v497, %v624
        %v657 = vadd.f32 %v500, %v625
        %v658 = vadd.f32 %v502, %v626
        %v659 = vadd.f32 %v505, %v627
        %v660 = vadd.f32 %v507, %v628
        %v661 = vadd.f32 %v510, %v629
        %v662 = vadd.f32 %v512, %v630
        %v663 = vadd.f32 %v515, %v631
        %v664 = vadd.f32 %v517, %v632
        %v665 = vadd.f32 %v520, %v633
        %v666 = vadd.f32 %v522, %v634
        %v667 = vadd.f32 %v525, %v635
        %v668 = vadd.f32 %v527, %v636
        %v669 = vadd.f32 %v530, %v637
        %v670 = vadd.f32 %v532, %v638
        %v671 = vadd.f32 %v535, %v639
        %v672 = vadd.f32 %v537, %v640
        %v673 = vadd.f32 %v540, %v641
        %v674 = vadd.f32 %v542, %v642
        %v675 = vadd.f32 %v545, %v643
        %v676 = vadd.f32 %v547, %v644
        %v677 = vmul.f32 %v645, 0.7978846
        %v678 = vmul.f32 %v646, 0.7978846
        %v679 = vmul.f32 %v647, 0.7978846
        %v680 = vmul.f32 %v648, 0.7978846
        %v681 = vmul.f32 %v649, 0.7978846
        %v682 = vmul.f32 %v650, 0.7978846
        %v683 = vmul.f32 %v651, 0.7978846
        %v684 = vmul.f32 %v652, 0.7978846
        %v685 = vmul.f32 %v653, 0.7978846
        %v686 = vmul.f32 %v654, 0.7978846
        %v687 = vmul.f32 %v655, 0.7978846
        %v688 = vmul.f32 %v656, 0.7978846
        %v689 = vmul.f32 %v657, 0.7978846
        %v690 = vmul.f32 %v658, 0.7978846
        %v691 = vmul.f32 %v659, 0.7978846
        %v692 = vmul.f32 %v660, 0.7978846
        %v693 = vmul.f32 %v661, 0.7978846
        %v694 = vmul.f32 %v662, 0.7978846
        %v695 = vmul.f32 %v663, 0.7978846
        %v696 = vmul.f32 %v664, 0.7978846
        %v697 = vmul.f32 %v665, 0.7978846
        %v698 = vmul.f32 %v666, 0.7978846
        %v699 = vmul.f32 %v667, 0.7978846
        %v700 = vmul.f32 %v668, 0.7978846
        %v701 = vmul.f32 %v669, 0.7978846
        %v702 = vmul.f32 %v670, 0.7978846
        %v703 = vmul.f32 %v671, 0.7978846
        %v704 = vmul.f32 %v672, 0.7978846
        %v705 = vmul.f32 %v673, 0.7978846
        %v706 = vmul.f32 %v674, 0.7978846
        %v707 = vmul.f32 %v675, 0.7978846
        %v708 = vmul.f32 %v676, 0.7978846
        %v709 = vtanh.pop %v677
        %v710 = vtanh.pop %v678
        %v711 = vtanh.pop %v679
        %v712 = vtanh.pop %v680
        %v713 = vtanh.pop %v681
        %v714 = vtanh.pop %v682
        %v715 = vtanh.pop %v683
        %v716 = vtanh.pop %v684
        %v717 = vtanh.pop %v685
        %v718 = vtanh.pop %v686
        %v719 = vtanh.pop %v687
        %v720 = vtanh.pop %v688
        %v721 = vtanh.pop %v689
        %v722 = vtanh.pop %v690
        %v723 = vtanh.pop %v691
        %v724 = vtanh.pop %v692
        %v725 = vtanh.pop %v693
        %v726 = vtanh.pop %v694
        %v727 = vtanh.pop %v695
        %v728 = vtanh.pop %v696
        %v729 = vtanh.pop %v697
        %v730 = vtanh.pop %v698
        %v731 = vtanh.pop %v699
        %v732 = vtanh.pop %v700
        %v733 = vtanh.pop %v701
        %v734 = vtanh.pop %v702
        %v735 = vtanh.pop %v703
        %v736 = vtanh.pop %v704
        %v737 = vtanh.pop %v705
        %v738 = vtanh.pop %v706
        %v739 = vtanh.pop %v707
        %v740 = vtanh.pop %v708
        %v741 = vadd.f32 %v709, 1.0
        %v742 = vadd.f32 %v710, 1.0
        %v743 = vadd.f32 %v711, 1.0
        %v744 = vadd.f32 %v712, 1.0
        %v745 = vadd.f32 %v713, 1.0
        %v746 = vadd.f32 %v714, 1.0
        %v747 = vadd.f32 %v715, 1.0
        %v748 = vadd.f32 %v716, 1.0
        %v749 = vadd.f32 %v717, 1.0
        %v750 = vadd.f32 %v718, 1.0
        %v751 = vadd.f32 %v719, 1.0
        %v752 = vadd.f32 %v720, 1.0
        %v753 = vadd.f32 %v721, 1.0
        %v754 = vadd.f32 %v722, 1.0
        %v755 = vadd.f32 %v723, 1.0
        %v756 = vadd.f32 %v724, 1.0
        %v757 = vadd.f32 %v725, 1.0
        %v758 = vadd.f32 %v726, 1.0
        %v759 = vadd.f32 %v727, 1.0
        %v760 = vadd.f32 %v728, 1.0
        %v761 = vadd.f32 %v729, 1.0
        %v762 = vadd.f32 %v730, 1.0
        %v763 = vadd.f32 %v731, 1.0
        %v764 = vadd.f32 %v732, 1.0
        %v765 = vadd.f32 %v733, 1.0
        %v766 = vadd.f32 %v734, 1.0
        %v767 = vadd.f32 %v735, 1.0
        %v768 = vadd.f32 %v736, 1.0
        %v769 = vadd.f32 %v737, 1.0
        %v770 = vadd.f32 %v738, 1.0
        %v771 = vadd.f32 %v739, 1.0
        %v772 = vadd.f32 %v740, 1.0
        %v773 = vmul.f32 %v741, 0.5
        %v774 = vmul.f32 %v742, 0.5
        %v775 = vmul.f32 %v743, 0.5
        %v776 = vmul.f32 %v744, 0.5
        %v777 = vmul.f32 %v745, 0.5
        %v778 = vmul.f32 %v746, 0.5
        %v779 = vmul.f32 %v747, 0.5
        %v780 = vmul.f32 %v748, 0.5
        %v781 = vmul.f32 %v749, 0.5
        %v782 = vmul.f32 %v750, 0.5
        %v783 = vmul.f32 %v751, 0.5
        %v784 = vmul.f32 %v752, 0.5
        %v785 = vmul.f32 %v753, 0.5
        %v786 = vmul.f32 %v754, 0.5
        %v787 = vmul.f32 %v755, 0.5
        %v788 = vmul.f32 %v756, 0.5
        %v789 = vmul.f32 %v757, 0.5
        %v790 = vmul.f32 %v758, 0.5
        %v791 = vmul.f32 %v759, 0.5
        %v792 = vmul.f32 %v760, 0.5
        %v793 = vmul.f32 %v761, 0.5
        %v794 = vmul.f32 %v762, 0.5
        %v795 = vmul.f32 %v763, 0.5
        %v796 = vmul.f32 %v764, 0.5
        %v797 = vmul.f32 %v765, 0.5
        %v798 = vmul.f32 %v766, 0.5
        %v799 = vmul.f32 %v767, 0.5
        %v800 = vmul.f32 %v768, 0.5
        %v801 = vmul.f32 %v769, 0.5
        %v802 = vmul.f32 %v770, 0.5
        %v803 = vmul.f32 %v771, 0.5
        %v804 = vmul.f32 %v772, 0.5
        %v805 = vmul.f32 %v470, %v773
        %v806 = vmul.f32 %v472, %v774
        %v807 = vmul.f32 %v475, %v775
        %v808 = vmul.f32 %v477, %v776
        %v809 = vmul.f32 %v480, %v777
        %v810 = vmul.f32 %v482, %v778
        %v811 = vmul.f32 %v485, %v779
        %v812 = vmul.f32 %v487, %v780
        %v813 = vmul.f32 %v490, %v781
        %v814 = vmul.f32 %v492, %v782
        %v815 = vmul.f32 %v495, %v783
        %v816 = vmul.f32 %v497, %v784
        %v817 = vmul.f32 %v500, %v785
        %v818 = vmul.f32 %v502, %v786
        %v819 = vmul.f32 %v505, %v787
        %v820 = vmul.f32 %v507, %v788
        %v821 = vmul.f32 %v510, %v789
        %v822 = vmul.f32 %v512, %v790
        %v823 = vmul.f32 %v515, %v791
        %v824 = vmul.f32 %v517, %v792
        %v825 = vmul.f32 %v520, %v793
        %v826 = vmul.f32 %v522, %v794
        %v827 = vmul.f32 %v525, %v795
        %v828 = vmul.f32 %v527, %v796
        %v829 = vmul.f32 %v530, %v797
        %v830 = vmul.f32 %v532, %v798
        %v831 = vmul.f32 %v535, %v799
        %v832 = vmul.f32 %v537, %v800
        %v833 = vmul.f32 %v540, %v801
        %v834 = vmul.f32 %v542, %v802
        %v835 = vmul.f32 %v545, %v803
        %v836 = vmul.f32 %v547, %v804
        %v837 = vld [vmem:[%s3] sm:$0x1]
        %v838 = vld [vmem:[%s4] sm:$0x1]
        %839 = vadd.xlane.f32.xlu0 %v805
        %v840 = vpop.xlane.xlu0 %839
        %841 = vadd.xlane.f32.xlu0 %v806
        %v842 = vpop.xlane.xlu0 %841
        %843 = vadd.xlane.f32.xlu0 %v807
        %v844 = vpop.xlane.xlu0 %843
        %845 = vadd.xlane.f32.xlu0 %v808
        %v846 = vpop.xlane.xlu0 %845
        %847 = vadd.xlane.f32.xlu0 %v809
        %v848 = vpop.xlane.xlu0 %847
        %849 = vadd.xlane.f32.xlu0 %v810
        %v850 = vpop.xlane.xlu0 %849
        %851 = vadd.xlane.f32.xlu0 %v811
        %v852 = vpop.xlane.xlu0 %851
        %853 = vadd.xlane.f32.xlu0 %v812
        %v854 = vpop.xlane.xlu0 %853
        %855 = vadd.xlane.f32.xlu0 %v813
        %v856 = vpop.xlane.xlu0 %855
        %857 = vadd.xlane.f32.xlu0 %v814
        %v858 = vpop.xlane.xlu0 %857
        %859 = vadd.xlane.f32.xlu0 %v815
        %v860 = vpop.xlane.xlu0 %859
        %861 = vadd.xlane.f32.xlu0 %v816
        %v862 = vpop.xlane.xlu0 %861
        %863 = vadd.xlane.f32.xlu0 %v817
        %v864 = vpop.xlane.xlu0 %863
        %865 = vadd.xlane.f32.xlu0 %v818
        %v866 = vpop.xlane.xlu0 %865
        %867 = vadd.xlane.f32.xlu0 %v819
        %v868 = vpop.xlane.xlu0 %867
        %869 = vadd.xlane.f32.xlu0 %v820
        %v870 = vpop.xlane.xlu0 %869
        %871 = vadd.xlane.f32.xlu0 %v821
        %v872 = vpop.xlane.xlu0 %871
        %873 = vadd.xlane.f32.xlu0 %v822
        %v874 = vpop.xlane.xlu0 %873
        %875 = vadd.xlane.f32.xlu0 %v823
        %v876 = vpop.xlane.xlu0 %875
        %877 = vadd.xlane.f32.xlu0 %v824
        %v878 = vpop.xlane.xlu0 %877
        %879 = vadd.xlane.f32.xlu0 %v825
        %v880 = vpop.xlane.xlu0 %879
        %881 = vadd.xlane.f32.xlu0 %v826
        %v882 = vpop.xlane.xlu0 %881
        %883 = vadd.xlane.f32.xlu0 %v827
        %v884 = vpop.xlane.xlu0 %883
        %885 = vadd.xlane.f32.xlu0 %v828
        %v886 = vpop.xlane.xlu0 %885
        %887 = vadd.xlane.f32.xlu0 %v829
        %v888 = vpop.xlane.xlu0 %887
        %889 = vadd.xlane.f32.xlu0 %v830
        %v890 = vpop.xlane.xlu0 %889
        %891 = vadd.xlane.f32.xlu0 %v831
        %v892 = vpop.xlane.xlu0 %891
        %893 = vadd.xlane.f32.xlu0 %v832
        %v894 = vpop.xlane.xlu0 %893
        %895 = vadd.xlane.f32.xlu0 %v833
        %v896 = vpop.xlane.xlu0 %895
        %897 = vadd.xlane.f32.xlu0 %v834
        %v898 = vpop.xlane.xlu0 %897
        %899 = vadd.xlane.f32.xlu0 %v835
        %v900 = vpop.xlane.xlu0 %899
        %901 = vadd.xlane.f32.xlu0 %v836
        %v902 = vpop.xlane.xlu0 %901
        %v903 = vrcp.pop 128.0
        %v904 = vmul.f32 128.0, %v903
        %v905 = vsub.f32 1.0, %v904
        %v906 = vmul.f32 %v903, %v905
        %v907 = vadd.f32 %v903, %v906
        %vm908 = vweird.f32 %v903
        %v909 = vsel %vm908, %v903, %v907
        %v910 = vmul.f32 %v840, %v909
        %v911 = vmul.f32 %v842, %v909
        %v912 = vmul.f32 %v844, %v909
        %v913 = vmul.f32 %v846, %v909
        %v914 = vmul.f32 %v848, %v909
        %v915 = vmul.f32 %v850, %v909
        %v916 = vmul.f32 %v852, %v909
        %v917 = vmul.f32 %v854, %v909
        %v918 = vmul.f32 %v856, %v909
        %v919 = vmul.f32 %v858, %v909
        %v920 = vmul.f32 %v860, %v909
        %v921 = vmul.f32 %v862, %v909
        %v922 = vmul.f32 %v864, %v909
        %v923 = vmul.f32 %v866, %v909
        %v924 = vmul.f32 %v868, %v909
        %v925 = vmul.f32 %v870, %v909
        %v926 = vmul.f32 %v872, %v909
        %v927 = vmul.f32 %v874, %v909
        %v928 = vmul.f32 %v876, %v909
        %v929 = vmul.f32 %v878, %v909
        %v930 = vmul.f32 %v880, %v909
        %v931 = vmul.f32 %v882, %v909
        %v932 = vmul.f32 %v884, %v909
        %v933 = vmul.f32 %v886, %v909
        %v934 = vmul.f32 %v888, %v909
        %v935 = vmul.f32 %v890, %v909
        %v936 = vmul.f32 %v892, %v909
        %v937 = vmul.f32 %v894, %v909
        %v938 = vmul.f32 %v896, %v909
        %v939 = vmul.f32 %v898, %v909
        %v940 = vmul.f32 %v900, %v909
        %v941 = vmul.f32 %v902, %v909
        %v942 = vsub.f32 %v805, %v910
        %v943 = vsub.f32 %v806, %v911
        %v944 = vsub.f32 %v807, %v912
        %v945 = vsub.f32 %v808, %v913
        %v946 = vsub.f32 %v809, %v914
        %v947 = vsub.f32 %v810, %v915
        %v948 = vsub.f32 %v811, %v916
        %v949 = vsub.f32 %v812, %v917
        %v950 = vsub.f32 %v813, %v918
        %v951 = vsub.f32 %v814, %v919
        %v952 = vsub.f32 %v815, %v920
        %v953 = vsub.f32 %v816, %v921
        %v954 = vsub.f32 %v817, %v922
        %v955 = vsub.f32 %v818, %v923
        %v956 = vsub.f32 %v819, %v924
        %v957 = vsub.f32 %v820, %v925
        %v958 = vsub.f32 %v821, %v926
        %v959 = vsub.f32 %v822, %v927
        %v960 = vsub.f32 %v823, %v928
        %v961 = vsub.f32 %v824, %v929
        %v962 = vsub.f32 %v825, %v930
        %v963 = vsub.f32 %v826, %v931
        %v964 = vsub.f32 %v827, %v932
        %v965 = vsub.f32 %v828, %v933
        %v966 = vsub.f32 %v829, %v934
        %v967 = vsub.f32 %v830, %v935
        %v968 = vsub.f32 %v831, %v936
        %v969 = vsub.f32 %v832, %v937
        %v970 = vsub.f32 %v833, %v938
        %v971 = vsub.f32 %v834, %v939
        %v972 = vsub.f32 %v835, %v940
        %v973 = vsub.f32 %v836, %v941
        %v974 = vmul.f32 %v942, %v942
        %v975 = vmul.f32 %v943, %v943
        %v976 = vmul.f32 %v944, %v944
        %v977 = vmul.f32 %v945, %v945
        %v978 = vmul.f32 %v946, %v946
        %v979 = vmul.f32 %v947, %v947
        %v980 = vmul.f32 %v948, %v948
        %v981 = vmul.f32 %v949, %v949
        %v982 = vmul.f32 %v950, %v950
        %v983 = vmul.f32 %v951, %v951
        %v984 = vmul.f32 %v952, %v952
        %v985 = vmul.f32 %v953, %v953
        %v986 = vmul.f32 %v954, %v954
        %v987 = vmul.f32 %v955, %v955
        %v988 = vmul.f32 %v956, %v956
        %v989 = vmul.f32 %v957, %v957
        %v990 = vmul.f32 %v958, %v958
        %v991 = vmul.f32 %v959, %v959
        %v992 = vmul.f32 %v960, %v960
        %v993 = vmul.f32 %v961, %v961
        %v994 = vmul.f32 %v962, %v962
        %v995 = vmul.f32 %v963, %v963
        %v996 = vmul.f32 %v964, %v964
        %v997 = vmul.f32 %v965, %v965
        %v998 = vmul.f32 %v966, %v966
        %v999 = vmul.f32 %v967, %v967
        %v1000 = vmul.f32 %v968, %v968
        %v1001 = vmul.f32 %v969, %v969
        %v1002 = vmul.f32 %v970, %v970
        %v1003 = vmul.f32 %v971, %v971
        %v1004 = vmul.f32 %v972, %v972
        %v1005 = vmul.f32 %v973, %v973
        %1006 = vadd.xlane.f32.xlu0 %v974
        %v1007 = vpop.xlane.xlu0 %1006
        %1008 = vadd.xlane.f32.xlu0 %v975
        %v1009 = vpop.xlane.xlu0 %1008
        %1010 = vadd.xlane.f32.xlu0 %v976
        %v1011 = vpop.xlane.xlu0 %1010
        %1012 = vadd.xlane.f32.xlu0 %v977
        %v1013 = vpop.xlane.xlu0 %1012
        %1014 = vadd.xlane.f32.xlu0 %v978
        %v1015 = vpop.xlane.xlu0 %1014
        %1016 = vadd.xlane.f32.xlu0 %v979
        %v1017 = vpop.xlane.xlu0 %1016
        %1018 = vadd.xlane.f32.xlu0 %v980
        %v1019 = vpop.xlane.xlu0 %1018
        %1020 = vadd.xlane.f32.xlu0 %v981
        %v1021 = vpop.xlane.xlu0 %1020
        %1022 = vadd.xlane.f32.xlu0 %v982
        %v1023 = vpop.xlane.xlu0 %1022
        %1024 = vadd.xlane.f32.xlu0 %v983
        %v1025 = vpop.xlane.xlu0 %1024
        %1026 = vadd.xlane.f32.xlu0 %v984
        %v1027 = vpop.xlane.xlu0 %1026
        %1028 = vadd.xlane.f32.xlu0 %v985
        %v1029 = vpop.xlane.xlu0 %1028
        %1030 = vadd.xlane.f32.xlu0 %v986
        %v1031 = vpop.xlane.xlu0 %1030
        %1032 = vadd.xlane.f32.xlu0 %v987
        %v1033 = vpop.xlane.xlu0 %1032
        %1034 = vadd.xlane.f32.xlu0 %v988
        %v1035 = vpop.xlane.xlu0 %1034
        %1036 = vadd.xlane.f32.xlu0 %v989
        %v1037 = vpop.xlane.xlu0 %1036
        %1038 = vadd.xlane.f32.xlu0 %v990
        %v1039 = vpop.xlane.xlu0 %1038
        %1040 = vadd.xlane.f32.xlu0 %v991
        %v1041 = vpop.xlane.xlu0 %1040
        %1042 = vadd.xlane.f32.xlu0 %v992
        %v1043 = vpop.xlane.xlu0 %1042
        %1044 = vadd.xlane.f32.xlu0 %v993
        %v1045 = vpop.xlane.xlu0 %1044
        %1046 = vadd.xlane.f32.xlu0 %v994
        %v1047 = vpop.xlane.xlu0 %1046
        %1048 = vadd.xlane.f32.xlu0 %v995
        %v1049 = vpop.xlane.xlu0 %1048
        %1050 = vadd.xlane.f32.xlu0 %v996
        %v1051 = vpop.xlane.xlu0 %1050
        %1052 = vadd.xlane.f32.xlu0 %v997
        %v1053 = vpop.xlane.xlu0 %1052
        %1054 = vadd.xlane.f32.xlu0 %v998
        %v1055 = vpop.xlane.xlu0 %1054
        %1056 = vadd.xlane.f32.xlu0 %v999
        %v1057 = vpop.xlane.xlu0 %1056
        %1058 = vadd.xlane.f32.xlu0 %v1000
        %v1059 = vpop.xlane.xlu0 %1058
        %1060 = vadd.xlane.f32.xlu0 %v1001
        %v1061 = vpop.xlane.xlu0 %1060
        %1062 = vadd.xlane.f32.xlu0 %v1002
        %v1063 = vpop.xlane.xlu0 %1062
        %1064 = vadd.xlane.f32.xlu0 %v1003
        %v1065 = vpop.xlane.xlu0 %1064
        %1066 = vadd.xlane.f32.xlu0 %v1004
        %v1067 = vpop.xlane.xlu0 %1066
        %1068 = vadd.xlane.f32.xlu0 %v1005
        %v1069 = vpop.xlane.xlu0 %1068
        %v1070 = vmul.f32 %v1007, %v909
        %v1071 = vmul.f32 %v1009, %v909
        %v1072 = vmul.f32 %v1011, %v909
        %v1073 = vmul.f32 %v1013, %v909
        %v1074 = vmul.f32 %v1015, %v909
        %v1075 = vmul.f32 %v1017, %v909
        %v1076 = vmul.f32 %v1019, %v909
        %v1077 = vmul.f32 %v1021, %v909
        %v1078 = vmul.f32 %v1023, %v909
        %v1079 = vmul.f32 %v1025, %v909
        %v1080 = vmul.f32 %v1027, %v909
        %v1081 = vmul.f32 %v1029, %v909
        %v1082 = vmul.f32 %v1031, %v909
        %v1083 = vmul.f32 %v1033, %v909
        %v1084 = vmul.f32 %v1035, %v909
        %v1085 = vmul.f32 %v1037, %v909
        %v1086 = vmul.f32 %v1039, %v909
        %v1087 = vmul.f32 %v1041, %v909
        %v1088 = vmul.f32 %v1043, %v909
        %v1089 = vmul.f32 %v1045, %v909
        %v1090 = vmul.f32 %v1047, %v909
        %v1091 = vmul.f32 %v1049, %v909
        %v1092 = vmul.f32 %v1051, %v909
        %v1093 = vmul.f32 %v1053, %v909
        %v1094 = vmul.f32 %v1055, %v909
        %v1095 = vmul.f32 %v1057, %v909
        %v1096 = vmul.f32 %v1059, %v909
        %v1097 = vmul.f32 %v1061, %v909
        %v1098 = vmul.f32 %v1063, %v909
        %v1099 = vmul.f32 %v1065, %v909
        %v1100 = vmul.f32 %v1067, %v909
        %v1101 = vmul.f32 %v1069, %v909
        %v1102 = vadd.f32 %v1070, 1e-05
        %v1103 = vadd.f32 %v1071, 1e-05
        %v1104 = vadd.f32 %v1072, 1e-05
        %v1105 = vadd.f32 %v1073, 1e-05
        %v1106 = vadd.f32 %v1074, 1e-05
        %v1107 = vadd.f32 %v1075, 1e-05
        %v1108 = vadd.f32 %v1076, 1e-05
        %v1109 = vadd.f32 %v1077, 1e-05
        %v1110 = vadd.f32 %v1078, 1e-05
        %v1111 = vadd.f32 %v1079, 1e-05
        %v1112 = vadd.f32 %v1080, 1e-05
        %v1113 = vadd.f32 %v1081, 1e-05
        %v1114 = vadd.f32 %v1082, 1e-05
        %v1115 = vadd.f32 %v1083, 1e-05
        %v1116 = vadd.f32 %v1084, 1e-05
        %v1117 = vadd.f32 %v1085, 1e-05
        %v1118 = vadd.f32 %v1086, 1e-05
        %v1119 = vadd.f32 %v1087, 1e-05
        %v1120 = vadd.f32 %v1088, 1e-05
        %v1121 = vadd.f32 %v1089, 1e-05
        %v1122 = vadd.f32 %v1090, 1e-05
        %v1123 = vadd.f32 %v1091, 1e-05
        %v1124 = vadd.f32 %v1092, 1e-05
        %v1125 = vadd.f32 %v1093, 1e-05
        %v1126 = vadd.f32 %v1094, 1e-05
        %v1127 = vadd.f32 %v1095, 1e-05
        %v1128 = vadd.f32 %v1096, 1e-05
        %v1129 = vadd.f32 %v1097, 1e-05
        %v1130 = vadd.f32 %v1098, 1e-05
        %v1131 = vadd.f32 %v1099, 1e-05
        %v1132 = vadd.f32 %v1100, 1e-05
        %v1133 = vadd.f32 %v1101, 1e-05
        %v1134 = vrsqrt.pop %v1102
        %v1135 = vmul.f32 %v1134, %v1102
        %v1136 = vmul.f32 %v1135, %v1134
        %v1137 = vmul.f32 0.5, %v1136
        %v1138 = vsub.f32 1.5, %v1137
        %v1139 = vmul.f32 %v1134, %v1138
        %vm1140 = vweird.f32 %v1102
        %vm1141 = vweird.f32 %v1134
        %vm1142 = vmor %vm1140, %vm1141
        %v1143 = vsel %vm1142, %v1134, %v1139
        %v1144 = vrsqrt.pop %v1103
        %v1145 = vmul.f32 %v1144, %v1103
        %v1146 = vmul.f32 %v1145, %v1144
        %v1147 = vmul.f32 0.5, %v1146
        %v1148 = vsub.f32 1.5, %v1147
        %v1149 = vmul.f32 %v1144, %v1148
        %vm1150 = vweird.f32 %v1103
        %vm1151 = vweird.f32 %v1144
        %vm1152 = vmor %vm1150, %vm1151
        %v1153 = vsel %vm1152, %v1144, %v1149
        %v1154 = vrsqrt.pop %v1104
        %v1155 = vmul.f32 %v1154, %v1104
        %v1156 = vmul.f32 %v1155, %v1154
        %v1157 = vmul.f32 0.5, %v1156
        %v1158 = vsub.f32 1.5, %v1157
        %v1159 = vmul.f32 %v1154, %v1158
        %vm1160 = vweird.f32 %v1104
        %vm1161 = vweird.f32 %v1154
        %vm1162 = vmor %vm1160, %vm1161
        %v1163 = vsel %vm1162, %v1154, %v1159
        %v1164 = vrsqrt.pop %v1105
        %v1165 = vmul.f32 %v1164, %v1105
        %v1166 = vmul.f32 %v1165, %v1164
        %v1167 = vmul.f32 0.5, %v1166
        %v1168 = vsub.f32 1.5, %v1167
        %v1169 = vmul.f32 %v1164, %v1168
        %vm1170 = vweird.f32 %v1105
        %vm1171 = vweird.f32 %v1164
        %vm1172 = vmor %vm1170, %vm1171
        %v1173 = vsel %vm1172, %v1164, %v1169
        %v1174 = vrsqrt.pop %v1106
        %v1175 = vmul.f32 %v1174, %v1106
        %v1176 = vmul.f32 %v1175, %v1174
        %v1177 = vmul.f32 0.5, %v1176
        %v1178 = vsub.f32 1.5, %v1177
        %v1179 = vmul.f32 %v1174, %v1178
        %vm1180 = vweird.f32 %v1106
        %vm1181 = vweird.f32 %v1174
        %vm1182 = vmor %vm1180, %vm1181
        %v1183 = vsel %vm1182, %v1174, %v1179
        %v1184 = vrsqrt.pop %v1107
        %v1185 = vmul.f32 %v1184, %v1107
        %v1186 = vmul.f32 %v1185, %v1184
        %v1187 = vmul.f32 0.5, %v1186
        %v1188 = vsub.f32 1.5, %v1187
        %v1189 = vmul.f32 %v1184, %v1188
        %vm1190 = vweird.f32 %v1107
        %vm1191 = vweird.f32 %v1184
        %vm1192 = vmor %vm1190, %vm1191
        %v1193 = vsel %vm1192, %v1184, %v1189
        %v1194 = vrsqrt.pop %v1108
        %v1195 = vmul.f32 %v1194, %v1108
        %v1196 = vmul.f32 %v1195, %v1194
        %v1197 = vmul.f32 0.5, %v1196
        %v1198 = vsub.f32 1.5, %v1197
        %v1199 = vmul.f32 %v1194, %v1198
        %vm1200 = vweird.f32 %v1108
        %vm1201 = vweird.f32 %v1194
        %vm1202 = vmor %vm1200, %vm1201
        %v1203 = vsel %vm1202, %v1194, %v1199
        %v1204 = vrsqrt.pop %v1109
        %v1205 = vmul.f32 %v1204, %v1109
        %v1206 = vmul.f32 %v1205, %v1204
        %v1207 = vmul.f32 0.5, %v1206
        %v1208 = vsub.f32 1.5, %v1207
        %v1209 = vmul.f32 %v1204, %v1208
        %vm1210 = vweird.f32 %v1109
        %vm1211 = vweird.f32 %v1204
        %vm1212 = vmor %vm1210, %vm1211
        %v1213 = vsel %vm1212, %v1204, %v1209
        %v1214 = vrsqrt.pop %v1110
        %v1215 = vmul.f32 %v1214, %v1110
        %v1216 = vmul.f32 %v1215, %v1214
        %v1217 = vmul.f32 0.5, %v1216
        %v1218 = vsub.f32 1.5, %v1217
        %v1219 = vmul.f32 %v1214, %v1218
        %vm1220 = vweird.f32 %v1110
        %vm1221 = vweird.f32 %v1214
        %vm1222 = vmor %vm1220, %vm1221
        %v1223 = vsel %vm1222, %v1214, %v1219
        %v1224 = vrsqrt.pop %v1111
        %v1225 = vmul.f32 %v1224, %v1111
        %v1226 = vmul.f32 %v1225, %v1224
        %v1227 = vmul.f32 0.5, %v1226
        %v1228 = vsub.f32 1.5, %v1227
        %v1229 = vmul.f32 %v1224, %v1228
        %vm1230 = vweird.f32 %v1111
        %vm1231 = vweird.f32 %v1224
        %vm1232 = vmor %vm1230, %vm1231
        %v1233 = vsel %vm1232, %v1224, %v1229
        %v1234 = vrsqrt.pop %v1112
        %v1235 = vmul.f32 %v1234, %v1112
        %v1236 = vmul.f32 %v1235, %v1234
        %v1237 = vmul.f32 0.5, %v1236
        %v1238 = vsub.f32 1.5, %v1237
        %v1239 = vmul.f32 %v1234, %v1238
        %vm1240 = vweird.f32 %v1112
        %vm1241 = vweird.f32 %v1234
        %vm1242 = vmor %vm1240, %vm1241
        %v1243 = vsel %vm1242, %v1234, %v1239
        %v1244 = vrsqrt.pop %v1113
        %v1245 = vmul.f32 %v1244, %v1113
        %v1246 = vmul.f32 %v1245, %v1244
        %v1247 = vmul.f32 0.5, %v1246
        %v1248 = vsub.f32 1.5, %v1247
        %v1249 = vmul.f32 %v1244, %v1248
        %vm1250 = vweird.f32 %v1113
        %vm1251 = vweird.f32 %v1244
        %vm1252 = vmor %vm1250, %vm1251
        %v1253 = vsel %vm1252, %v1244, %v1249
        %v1254 = vrsqrt.pop %v1114
        %v1255 = vmul.f32 %v1254, %v1114
        %v1256 = vmul.f32 %v1255, %v1254
        %v1257 = vmul.f32 0.5, %v1256
        %v1258 = vsub.f32 1.5, %v1257
        %v1259 = vmul.f32 %v1254, %v1258
        %vm1260 = vweird.f32 %v1114
        %vm1261 = vweird.f32 %v1254
        %vm1262 = vmor %vm1260, %vm1261
        %v1263 = vsel %vm1262, %v1254, %v1259
        %v1264 = vrsqrt.pop %v1115
        %v1265 = vmul.f32 %v1264, %v1115
        %v1266 = vmul.f32 %v1265, %v1264
        %v1267 = vmul.f32 0.5, %v1266
        %v1268 = vsub.f32 1.5, %v1267
        %v1269 = vmul.f32 %v1264, %v1268
        %vm1270 = vweird.f32 %v1115
        %vm1271 = vweird.f32 %v1264
        %vm1272 = vmor %vm1270, %vm1271
        %v1273 = vsel %vm1272, %v1264, %v1269
        %v1274 = vrsqrt.pop %v1116
        %v1275 = vmul.f32 %v1274, %v1116
        %v1276 = vmul.f32 %v1275, %v1274
        %v1277 = vmul.f32 0.5, %v1276
        %v1278 = vsub.f32 1.5, %v1277
        %v1279 = vmul.f32 %v1274, %v1278
        %vm1280 = vweird.f32 %v1116
        %vm1281 = vweird.f32 %v1274
        %vm1282 = vmor %vm1280, %vm1281
        %v1283 = vsel %vm1282, %v1274, %v1279
        %v1284 = vrsqrt.pop %v1117
        %v1285 = vmul.f32 %v1284, %v1117
        %v1286 = vmul.f32 %v1285, %v1284
        %v1287 = vmul.f32 0.5, %v1286
        %v1288 = vsub.f32 1.5, %v1287
        %v1289 = vmul.f32 %v1284, %v1288
        %vm1290 = vweird.f32 %v1117
        %vm1291 = vweird.f32 %v1284
        %vm1292 = vmor %vm1290, %vm1291
        %v1293 = vsel %vm1292, %v1284, %v1289
        %v1294 = vrsqrt.pop %v1118
        %v1295 = vmul.f32 %v1294, %v1118
        %v1296 = vmul.f32 %v1295, %v1294
        %v1297 = vmul.f32 0.5, %v1296
        %v1298 = vsub.f32 1.5, %v1297
        %v1299 = vmul.f32 %v1294, %v1298
        %vm1300 = vweird.f32 %v1118
        %vm1301 = vweird.f32 %v1294
        %vm1302 = vmor %vm1300, %vm1301
        %v1303 = vsel %vm1302, %v1294, %v1299
        %v1304 = vrsqrt.pop %v1119
        %v1305 = vmul.f32 %v1304, %v1119
        %v1306 = vmul.f32 %v1305, %v1304
        %v1307 = vmul.f32 0.5, %v1306
        %v1308 = vsub.f32 1.5, %v1307
        %v1309 = vmul.f32 %v1304, %v1308
        %vm1310 = vweird.f32 %v1119
        %vm1311 = vweird.f32 %v1304
        %vm1312 = vmor %vm1310, %vm1311
        %v1313 = vsel %vm1312, %v1304, %v1309
        %v1314 = vrsqrt.pop %v1120
        %v1315 = vmul.f32 %v1314, %v1120
        %v1316 = vmul.f32 %v1315, %v1314
        %v1317 = vmul.f32 0.5, %v1316
        %v1318 = vsub.f32 1.5, %v1317
        %v1319 = vmul.f32 %v1314, %v1318
        %vm1320 = vweird.f32 %v1120
        %vm1321 = vweird.f32 %v1314
        %vm1322 = vmor %vm1320, %vm1321
        %v1323 = vsel %vm1322, %v1314, %v1319
        %v1324 = vrsqrt.pop %v1121
        %v1325 = vmul.f32 %v1324, %v1121
        %v1326 = vmul.f32 %v1325, %v1324
        %v1327 = vmul.f32 0.5, %v1326
        %v1328 = vsub.f32 1.5, %v1327
        %v1329 = vmul.f32 %v1324, %v1328
        %vm1330 = vweird.f32 %v1121
        %vm1331 = vweird.f32 %v1324
        %vm1332 = vmor %vm1330, %vm1331
        %v1333 = vsel %vm1332, %v1324, %v1329
        %v1334 = vrsqrt.pop %v1122
        %v1335 = vmul.f32 %v1334, %v1122
        %v1336 = vmul.f32 %v1335, %v1334
        %v1337 = vmul.f32 0.5, %v1336
        %v1338 = vsub.f32 1.5, %v1337
        %v1339 = vmul.f32 %v1334, %v1338
        %vm1340 = vweird.f32 %v1122
        %vm1341 = vweird.f32 %v1334
        %vm1342 = vmor %vm1340, %vm1341
        %v1343 = vsel %vm1342, %v1334, %v1339
        %v1344 = vrsqrt.pop %v1123
        %v1345 = vmul.f32 %v1344, %v1123
        %v1346 = vmul.f32 %v1345, %v1344
        %v1347 = vmul.f32 0.5, %v1346
        %v1348 = vsub.f32 1.5, %v1347
        %v1349 = vmul.f32 %v1344, %v1348
        %vm1350 = vweird.f32 %v1123
        %vm1351 = vweird.f32 %v1344
        %vm1352 = vmor %vm1350, %vm1351
        %v1353 = vsel %vm1352, %v1344, %v1349
        %v1354 = vrsqrt.pop %v1124
        %v1355 = vmul.f32 %v1354, %v1124
        %v1356 = vmul.f32 %v1355, %v1354
        %v1357 = vmul.f32 0.5, %v1356
        %v1358 = vsub.f32 1.5, %v1357
        %v1359 = vmul.f32 %v1354, %v1358
        %vm1360 = vweird.f32 %v1124
        %vm1361 = vweird.f32 %v1354
        %vm1362 = vmor %vm1360, %vm1361
        %v1363 = vsel %vm1362, %v1354, %v1359
        %v1364 = vrsqrt.pop %v1125
        %v1365 = vmul.f32 %v1364, %v1125
        %v1366 = vmul.f32 %v1365, %v1364
        %v1367 = vmul.f32 0.5, %v1366
        %v1368 = vsub.f32 1.5, %v1367
        %v1369 = vmul.f32 %v1364, %v1368
        %vm1370 = vweird.f32 %v1125
        %vm1371 = vweird.f32 %v1364
        %vm1372 = vmor %vm1370, %vm1371
        %v1373 = vsel %vm1372, %v1364, %v1369
        %v1374 = vrsqrt.pop %v1126
        %v1375 = vmul.f32 %v1374, %v1126
        %v1376 = vmul.f32 %v1375, %v1374
        %v1377 = vmul.f32 0.5, %v1376
        %v1378 = vsub.f32 1.5, %v1377
        %v1379 = vmul.f32 %v1374, %v1378
        %vm1380 = vweird.f32 %v1126
        %vm1381 = vweird.f32 %v1374
        %vm1382 = vmor %vm1380, %vm1381
        %v1383 = vsel %vm1382, %v1374, %v1379
        %v1384 = vrsqrt.pop %v1127
        %v1385 = vmul.f32 %v1384, %v1127
        %v1386 = vmul.f32 %v1385, %v1384
        %v1387 = vmul.f32 0.5, %v1386
        %v1388 = vsub.f32 1.5, %v1387
        %v1389 = vmul.f32 %v1384, %v1388
        %vm1390 = vweird.f32 %v1127
        %vm1391 = vweird.f32 %v1384
        %vm1392 = vmor %vm1390, %vm1391
        %v1393 = vsel %vm1392, %v1384, %v1389
        %v1394 = vrsqrt.pop %v1128
        %v1395 = vmul.f32 %v1394, %v1128
        %v1396 = vmul.f32 %v1395, %v1394
        %v1397 = vmul.f32 0.5, %v1396
        %v1398 = vsub.f32 1.5, %v1397
        %v1399 = vmul.f32 %v1394, %v1398
        %vm1400 = vweird.f32 %v1128
        %vm1401 = vweird.f32 %v1394
        %vm1402 = vmor %vm1400, %vm1401
        %v1403 = vsel %vm1402, %v1394, %v1399
        %v1404 = vrsqrt.pop %v1129
        %v1405 = vmul.f32 %v1404, %v1129
        %v1406 = vmul.f32 %v1405, %v1404
        %v1407 = vmul.f32 0.5, %v1406
        %v1408 = vsub.f32 1.5, %v1407
        %v1409 = vmul.f32 %v1404, %v1408
        %vm1410 = vweird.f32 %v1129
        %vm1411 = vweird.f32 %v1404
        %vm1412 = vmor %vm1410, %vm1411
        %v1413 = vsel %vm1412, %v1404, %v1409
        %v1414 = vrsqrt.pop %v1130
        %v1415 = vmul.f32 %v1414, %v1130
        %v1416 = vmul.f32 %v1415, %v1414
        %v1417 = vmul.f32 0.5, %v1416
        %v1418 = vsub.f32 1.5, %v1417
        %v1419 = vmul.f32 %v1414, %v1418
        %vm1420 = vweird.f32 %v1130
        %vm1421 = vweird.f32 %v1414
        %vm1422 = vmor %vm1420, %vm1421
        %v1423 = vsel %vm1422, %v1414, %v1419
        %v1424 = vrsqrt.pop %v1131
        %v1425 = vmul.f32 %v1424, %v1131
        %v1426 = vmul.f32 %v1425, %v1424
        %v1427 = vmul.f32 0.5, %v1426
        %v1428 = vsub.f32 1.5, %v1427
        %v1429 = vmul.f32 %v1424, %v1428
        %vm1430 = vweird.f32 %v1131
        %vm1431 = vweird.f32 %v1424
        %vm1432 = vmor %vm1430, %vm1431
        %v1433 = vsel %vm1432, %v1424, %v1429
        %v1434 = vrsqrt.pop %v1132
        %v1435 = vmul.f32 %v1434, %v1132
        %v1436 = vmul.f32 %v1435, %v1434
        %v1437 = vmul.f32 0.5, %v1436
        %v1438 = vsub.f32 1.5, %v1437
        %v1439 = vmul.f32 %v1434, %v1438
        %vm1440 = vweird.f32 %v1132
        %vm1441 = vweird.f32 %v1434
        %vm1442 = vmor %vm1440, %vm1441
        %v1443 = vsel %vm1442, %v1434, %v1439
        %v1444 = vrsqrt.pop %v1133
        %v1445 = vmul.f32 %v1444, %v1133
        %v1446 = vmul.f32 %v1445, %v1444
        %v1447 = vmul.f32 0.5, %v1446
        %v1448 = vsub.f32 1.5, %v1447
        %v1449 = vmul.f32 %v1444, %v1448
        %vm1450 = vweird.f32 %v1133
        %vm1451 = vweird.f32 %v1444
        %vm1452 = vmor %vm1450, %vm1451
        %v1453 = vsel %vm1452, %v1444, %v1449
        %v1454 = vmul.f32 %v942, %v1143
        %v1455 = vmul.f32 %v943, %v1153
        %v1456 = vmul.f32 %v944, %v1163
        %v1457 = vmul.f32 %v945, %v1173
        %v1458 = vmul.f32 %v946, %v1183
        %v1459 = vmul.f32 %v947, %v1193
        %v1460 = vmul.f32 %v948, %v1203
        %v1461 = vmul.f32 %v949, %v1213
        %v1462 = vmul.f32 %v950, %v1223
        %v1463 = vmul.f32 %v951, %v1233
        %v1464 = vmul.f32 %v952, %v1243
        %v1465 = vmul.f32 %v953, %v1253
        %v1466 = vmul.f32 %v954, %v1263
        %v1467 = vmul.f32 %v955, %v1273
        %v1468 = vmul.f32 %v956, %v1283
        %v1469 = vmul.f32 %v957, %v1293
        %v1470 = vmul.f32 %v958, %v1303
        %v1471 = vmul.f32 %v959, %v1313
        %v1472 = vmul.f32 %v960, %v1323
        %v1473 = vmul.f32 %v961, %v1333
        %v1474 = vmul.f32 %v962, %v1343
        %v1475 = vmul.f32 %v963, %v1353
        %v1476 = vmul.f32 %v964, %v1363
        %v1477 = vmul.f32 %v965, %v1373
        %v1478 = vmul.f32 %v966, %v1383
        %v1479 = vmul.f32 %v967, %v1393
        %v1480 = vmul.f32 %v968, %v1403
        %v1481 = vmul.f32 %v969, %v1413
        %v1482 = vmul.f32 %v970, %v1423
        %v1483 = vmul.f32 %v971, %v1433
        %v1484 = vmul.f32 %v972, %v1443
        %v1485 = vmul.f32 %v973, %v1453
        %v1487 = vperm.slane %v837, 0
        %v1489 = vmul.f32 %v1454, %v1487
        %v1490 = vmul.f32 %v1455, %v1487
        %v1491 = vmul.f32 %v1456, %v1487
        %v1492 = vmul.f32 %v1457, %v1487
        %v1493 = vmul.f32 %v1458, %v1487
        %v1494 = vmul.f32 %v1459, %v1487
        %v1495 = vmul.f32 %v1460, %v1487
        %v1496 = vmul.f32 %v1461, %v1487
        %v1497 = vmul.f32 %v1462, %v1487
        %v1498 = vmul.f32 %v1463, %v1487
        %v1499 = vmul.f32 %v1464, %v1487
        %v1500 = vmul.f32 %v1465, %v1487
        %v1501 = vmul.f32 %v1466, %v1487
        %v1502 = vmul.f32 %v1467, %v1487
        %v1503 = vmul.f32 %v1468, %v1487
        %v1504 = vmul.f32 %v1469, %v1487
        %v1505 = vmul.f32 %v1470, %v1487
        %v1506 = vmul.f32 %v1471, %v1487
        %v1507 = vmul.f32 %v1472, %v1487
        %v1508 = vmul.f32 %v1473, %v1487
        %v1509 = vmul.f32 %v1474, %v1487
        %v1510 = vmul.f32 %v1475, %v1487
        %v1511 = vmul.f32 %v1476, %v1487
        %v1512 = vmul.f32 %v1477, %v1487
        %v1513 = vmul.f32 %v1478, %v1487
        %v1514 = vmul.f32 %v1479, %v1487
        %v1515 = vmul.f32 %v1480, %v1487
        %v1516 = vmul.f32 %v1481, %v1487
        %v1517 = vmul.f32 %v1482, %v1487
        %v1518 = vmul.f32 %v1483, %v1487
        %v1519 = vmul.f32 %v1484, %v1487
        %v1520 = vmul.f32 %v1485, %v1487
        %v1522 = vperm.slane %v838, 0
        %v1524 = vadd.f32 %v1489, %v1522
        %v1525 = vadd.f32 %v1490, %v1522
        %v1526 = vadd.f32 %v1491, %v1522
        %v1527 = vadd.f32 %v1492, %v1522
        %v1528 = vadd.f32 %v1493, %v1522
        %v1529 = vadd.f32 %v1494, %v1522
        %v1530 = vadd.f32 %v1495, %v1522
        %v1531 = vadd.f32 %v1496, %v1522
        %v1532 = vadd.f32 %v1497, %v1522
        %v1533 = vadd.f32 %v1498, %v1522
        %v1534 = vadd.f32 %v1499, %v1522
        %v1535 = vadd.f32 %v1500, %v1522
        %v1536 = vadd.f32 %v1501, %v1522
        %v1537 = vadd.f32 %v1502, %v1522
        %v1538 = vadd.f32 %v1503, %v1522
        %v1539 = vadd.f32 %v1504, %v1522
        %v1540 = vadd.f32 %v1505, %v1522
        %v1541 = vadd.f32 %v1506, %v1522
        %v1542 = vadd.f32 %v1507, %v1522
        %v1543 = vadd.f32 %v1508, %v1522
        %v1544 = vadd.f32 %v1509, %v1522
        %v1545 = vadd.f32 %v1510, %v1522
        %v1546 = vadd.f32 %v1511, %v1522
        %v1547 = vadd.f32 %v1512, %v1522
        %v1548 = vadd.f32 %v1513, %v1522
        %v1549 = vadd.f32 %v1514, %v1522
        %v1550 = vadd.f32 %v1515, %v1522
        %v1551 = vadd.f32 %v1516, %v1522
        %v1552 = vadd.f32 %v1517, %v1522
        %v1553 = vadd.f32 %v1518, %v1522
        %v1554 = vadd.f32 %v1519, %v1522
        %v1555 = vadd.f32 %v1520, %v1522
        %v1556 = vpack.c.bf16 %v1524, %v1524
        %v1557 = vpack.c.bf16 %v1525, %v1525
        %v1558 = vpack.c.bf16 %v1526, %v1526
        %v1559 = vpack.c.bf16 %v1527, %v1527
        %v1560 = vpack.c.bf16 %v1528, %v1528
        %v1561 = vpack.c.bf16 %v1529, %v1529
        %v1562 = vpack.c.bf16 %v1530, %v1530
        %v1563 = vpack.c.bf16 %v1531, %v1531
        %v1564 = vpack.c.bf16 %v1532, %v1532
        %v1565 = vpack.c.bf16 %v1533, %v1533
        %v1566 = vpack.c.bf16 %v1534, %v1534
        %v1567 = vpack.c.bf16 %v1535, %v1535
        %v1568 = vpack.c.bf16 %v1536, %v1536
        %v1569 = vpack.c.bf16 %v1537, %v1537
        %v1570 = vpack.c.bf16 %v1538, %v1538
        %v1571 = vpack.c.bf16 %v1539, %v1539
        %v1572 = vpack.c.bf16 %v1540, %v1540
        %v1573 = vpack.c.bf16 %v1541, %v1541
        %v1574 = vpack.c.bf16 %v1542, %v1542
        %v1575 = vpack.c.bf16 %v1543, %v1543
        %v1576 = vpack.c.bf16 %v1544, %v1544
        %v1577 = vpack.c.bf16 %v1545, %v1545
        %v1578 = vpack.c.bf16 %v1546, %v1546
        %v1579 = vpack.c.bf16 %v1547, %v1547
        %v1580 = vpack.c.bf16 %v1548, %v1548
        %v1581 = vpack.c.bf16 %v1549, %v1549
        %v1582 = vpack.c.bf16 %v1550, %v1550
        %v1583 = vpack.c.bf16 %v1551, %v1551
        %v1584 = vpack.c.bf16 %v1552, %v1552
        %v1585 = vpack.c.bf16 %v1553, %v1553
        %v1586 = vpack.c.bf16 %v1554, %v1554
        %v1587 = vpack.c.bf16 %v1555, %v1555
        %1588 = vst [vmem:[%s261] sm:$0xf] %v1556
        %1589 = vst [vmem:[%s261 + $0x4] sm:$0xf] %v1557
        %1590 = vst [vmem:[%s261 + $0x8] sm:$0xf] %v1558
        %1591 = vst [vmem:[%s261 + $0xc] sm:$0xf] %v1559
        %1592 = vst [vmem:[%s261 + $0x10] sm:$0xf] %v1560
        %1593 = vst [vmem:[%s261 + $0x14] sm:$0xf] %v1561
        %1594 = vst [vmem:[%s261 + $0x18] sm:$0xf] %v1562
        %1595 = vst [vmem:[%s261 + $0x1c] sm:$0xf] %v1563
        %1596 = vst [vmem:[%s261 + $0x20] sm:$0xf] %v1564
        %1597 = vst [vmem:[%s261 + $0x24] sm:$0xf] %v1565
        %1598 = vst [vmem:[%s261 + $0x28] sm:$0xf] %v1566
        %1599 = vst [vmem:[%s261 + $0x2c] sm:$0xf] %v1567
        %1600 = vst [vmem:[%s261 + $0x30] sm:$0xf] %v1568
        %1601 = vst [vmem:[%s261 + $0x34] sm:$0xf] %v1569
        %1602 = vst [vmem:[%s261 + $0x38] sm:$0xf] %v1570
        %1603 = vst [vmem:[%s261 + $0x3c] sm:$0xf] %v1571
        %1604 = vst [vmem:[%s261 + $0x40] sm:$0xf] %v1572
        %1605 = vst [vmem:[%s261 + $0x44] sm:$0xf] %v1573
        %1606 = vst [vmem:[%s261 + $0x48] sm:$0xf] %v1574
        %1607 = vst [vmem:[%s261 + $0x4c] sm:$0xf] %v1575
        %1608 = vst [vmem:[%s261 + $0x50] sm:$0xf] %v1576
        %1609 = vst [vmem:[%s261 + $0x54] sm:$0xf] %v1577
        %1610 = vst [vmem:[%s261 + $0x58] sm:$0xf] %v1578
        %1611 = vst [vmem:[%s261 + $0x5c] sm:$0xf] %v1579
        %1612 = vst [vmem:[%s261 + $0x60] sm:$0xf] %v1580
        %1613 = vst [vmem:[%s261 + $0x64] sm:$0xf] %v1581
        %1614 = vst [vmem:[%s261 + $0x68] sm:$0xf] %v1582
        %1615 = vst [vmem:[%s261 + $0x6c] sm:$0xf] %v1583
        %1616 = vst [vmem:[%s261 + $0x70] sm:$0xf] %v1584
        %1617 = vst [vmem:[%s261 + $0x74] sm:$0xf] %v1585
        %1618 = vst [vmem:[%s261 + $0x78] sm:$0xf] %v1586
        %1619 = vst [vmem:[%s261 + $0x7c] sm:$0xf] %v1587
        %s1620 = sand.u32 %s141, 1
        %s1621 = scalar_lea.sflag [#allocation4], %s1620
        %s1622 = sand.u32 %s141, 1
        %s1623 = smul.addr %s1622, 128
        %s1624 = scalar_lea.vmem [#allocation7], %s1623
        // Predicated region
        $region49: #{tpu_custom_call.1} parent=39 // pred_check
          %p1625 = pneg %p151
        $region50: #{tpu_custom_call.1} parent=39 // pred_check_branch
          %1627 = sbr.rel (%p1625) target = $region52
        $region51: #{tpu_custom_call.1} parent=39 // pred_region
          %s1628 = smul.u32 32, %s23
          %1630 = vsyncadd %s1621, 0
          %s1631 = smul.addr %s1628, 4
          %s1632 = scalar_lea.hbm %s5, %s1631
          %s1633 = sshll.u32 %s1624, 4
          %s1634 = int_to_ptr.vmem [resolvable:$true] %s1633
          %s1635 = sshll.u32 %s1632, 4
          %s1636 = int_to_ptr.hbm [resolvable:$true] %s1635
          %1641 = dma.vmem_to_hbm [thread:$0]  %s1634, 2048, %s1636, %s1621, 64, 64, 4
        $region52: #{tpu_custom_call.1} parent=39 // pred_fallthru
          _
      $region40: #{tpu_custom_call.1} parent=5 // pred_fallthru
        _
      %p1642 = scmp.le.s32.totalorder 2, %s18
      // Predicated region
      $region53: #{tpu_custom_call.1} parent=5 // pred_check
        %p1643 = pneg %p1642
      $region54: #{tpu_custom_call.1} parent=5 // pred_check_branch
        %1645 = sbr.rel (%p1643) target = $region56
      $region55: #{tpu_custom_call.1} parent=5 // pred_region
        %s1646 = ssub.s32 %s18, 2
        // Predicated region
        $region57: #{tpu_custom_call.1} parent=55 // pred_check
          %p1647 = pneg %p157
        $region58: #{tpu_custom_call.1} parent=55 // pred_check_branch
          %1649 = sbr.rel (%p1647) target = $region60
        $region59: #{tpu_custom_call.1} parent=55 // pred_region
          %s1650 = sand.u32 %s142, 1
          %s1651 = scalar_lea.sflag [#allocation4], %s1650
          %s1652 = sand.u32 %s142, 1
          %s1653 = smul.addr %s1652, 128
          %s1654 = scalar_lea.vmem [#allocation7], %s1653
          %1656 = dma.done %s1651, 2048
        $region60: #{tpu_custom_call.1} parent=55 // pred_fallthru
          _
      $region56: #{tpu_custom_call.1} parent=5 // pred_fallthru
        _
    $region6: #{tpu_custom_call.1} parent=1 // loop_footer
      %s22 = sadd.s32 1, %s18
    $region7: #{tpu_custom_call.1} parent=1 // loop_footer_branch
      %17 = sbr.rel target = $region3
    $region8: #{tpu_custom_call.1} parent=1 // loop_exit
      _
    %1657 = vsyncpa [#allocation3], 1
    %s1658 = scalar_lea.sflag [#allocation3], 1
    %1659 = vsyncpa %s1658, 1
    %1660 = vsyncpa [#allocation6], 1
    %1661 = vsyncpa [#allocation4], 1
    %s1662 = scalar_lea.sflag [#allocation4], 1
    %1663 = vsyncpa %s1662, 1

</llo_original>
